<compile_context>
chip_gen: v6e
topology: v6e:2x2x1
jax: 0.10.0
libtpu: 0.0.40
codegen_flags: <defaults>
</compile_context>

<pallas_src>
import numpy as np
import jax
import jax.numpy as jnp
from jax.experimental import pallas as pl
from jax.experimental.pallas import tpu as pltpu

# ---------------- small model config (consistent with the module) -----------
B = 2            # default test batch
T = 8            # seq_len
F = 16           # in_dim
E = 64           # encoder = [64]
H = 32           # hidden_dim
L = 2            # num_layers (layers >= 1 are dead w.r.t. the output)
D1, D2 = 256, 128  # decoder = [256, 128] (scaled-down [1024, 512])
OUT = 5          # output_dim
OUTP = 128       # lane-dense padded output width
EPS = 1e-5


def _round_up(x, m):
    return (x + m - 1) // m * m


# --------------------------- fused forward kernel ----------------------------
def fused_kernel(x_ref, s1_ref, encb_ref, wenc_ref, wih_ref, whh_ref, bias_ref,
                 wd1_hbm, wd2_hbm, wd3_ref,
                 o_ref,
                 wd1_vmem, wd2_vmem, dma_sem):
    f32 = jnp.float32
    bf16 = jnp.bfloat16
    bt = o_ref.shape[0]                       # batch-tile rows (multiple of 8)

    # Kick off the decoder-weight copy-in (HBM -> VMEM scratch) now; it overlaps
    # with the encoder matmuls and the 8-step recurrence below.  Done per grid
    # step so it is correct regardless of how "parallel" steps are split across
    # TensorCores; the ~80 KiB re-fetch is fully hidden behind compute.
    cp1 = pltpu.make_async_copy(wd1_hbm, wd1_vmem, dma_sem.at[0])
    cp2 = pltpu.make_async_copy(wd2_hbm, wd2_vmem, dma_sem.at[1])
    cp1.start()
    cp2.start()

    # ---- unpack the packed bias slab (static slices) ----
    slab = bias_ref[...]                      # (4, D1) f32
    blstm = slab[0:1, 0:4 * H]                # (1, 4H)   LSTM gate bias (b_ih + b_hh)
    bd1 = slab[1:2, :]                        # (1, D1)   decoder bias 1 (BN2 folded in)
    bd2 = slab[2:3, 0:D2]                     # (1, D2)   decoder bias 2
    bd3 = slab[3:4, 0:OUTP]                   # (1, OUTP) decoder bias 3 (zero-padded)

    # ---- encoder: (x * s1) @ w_enc + per-row bias (BN1 shift + b_enc folded) ----
    x = x_ref[0]                              # (T*bt, F), rows r = t*bt + b
    xb = (x * s1_ref[...]).astype(bf16)
    enc = jnp.maximum(
        jnp.dot(xb, wenc_ref[...], preferred_element_type=f32) + encb_ref[...],
        0.0)                                                     # (T*bt, E) f32

    # ---- LSTM layer 0: hoisted input projection for ALL timesteps ----
    gx = (jnp.dot(enc.astype(bf16), wih_ref[...], preferred_element_type=f32)
          + blstm)                                               # (T*bt, 4H) f32
    whh = whh_ref[...]                                           # (H, 4H) bf16

    # single-tanh gate activation mask: lanes [2H, 3H) are the "g" gate (tanh),
    # all other lanes are sigmoid(x) = 0.5 * tanh(x/2) + 0.5.
    lane = jax.lax.broadcasted_iota(jnp.int32, (bt, 4 * H), 1)
    g_mask = (lane >= 2 * H) & (lane < 3 * H)

    h = jnp.zeros((bt, H), f32)
    c = jnp.zeros((bt, H), f32)
    for t in range(T):                        # static unroll (T = 8)
        # sublane-tile-aligned static slice (bt is a multiple of 8): no XLU shuffle
        g = gx[t * bt:(t + 1) * bt, :]        # (bt, 4H)
        if t > 0:                             # h == 0 at t = 0 -> skip dead matmul
            # TODO(synk): could hold whh resident in the MXU across the 8 steps via
            # pltpu.matmul_push_rhs/acc_lhs/pop; we rely on Mosaic hoisting the RHS
            # weight load out of this fully unrolled loop instead.
            g = g + jnp.dot(h.astype(jnp.bfloat16), whh, preferred_element_type=f32)
        pre = jnp.where(g_mask, g, 0.5 * g)
        th = jnp.tanh(pre)                    # ONE transcendental pass per step
        act = jnp.where(g_mask, th, 0.5 * th + 0.5)
        i_g = act[:, 0:H]
        f_g = act[:, H:2 * H]
        g_g = act[:, 2 * H:3 * H]
        o_g = act[:, 3 * H:4 * H]
        c = f_g * c + i_g * g_g
        h = o_g * jnp.tanh(c)
    # h is now h_n[0]: final hidden state of LSTM layer 0, shape (bt, H)

    # decoder weights are needed only now -> wait as late as possible
    cp1.wait()
    cp2.wait()

    # ---- decoder: Linear+ReLU, Linear+ReLU, Linear (BN2 folded into w_d1/b_d1) ----
    y = jnp.maximum(
        jnp.dot(h.astype(bf16), wd1_vmem[...], preferred_element_type=f32) + bd1, 0.0)
    y = jnp.maximum(
        jnp.dot(y.astype(bf16), wd2_vmem[...], preferred_element_type=f32) + bd2, 0.0)
    # lane-dense (bt, 128) store; wrapper slices back to (B, OUT)
    o_ref[...] = (jnp.dot(y.astype(bf16), wd3_ref[...], preferred_element_type=f32)
                  + bd3)


# ------------------------------- wrapper -------------------------------------
def forward(hist, p, *, block_b=None):
    """Eval-mode LSTMStockModel forward as one fused Pallas call.

    hist: (batch, T, F) float32.  Returns (batch, OUT) float32.
    block_b: batch-tile rows per grid step (rounded up to a multiple of 8).
    """
    f32, bf16 = jnp.float32, jnp.bfloat16
    bx = hist.shape[0]
    if block_b is None:
        block_b = min(256, _round_up(max(bx, 1), 8))
    bt = _round_up(block_b, 8)
    b_pad = _round_up(bx, bt)
    n_tiles = b_pad // bt

    # ---- fold BatchNorm1d(seq_len): per-row scale + per-row encoder bias ----
    s1 = p['bn1_gamma'] * jax.lax.rsqrt(p['bn1_var'] + EPS)              # (T,)
    sh1 = p['bn1_beta'] - p['bn1_mean'] * s1                             # (T,)
    s1_rows = jnp.repeat(s1, bt)[:, None]                                # (T*bt, 1)
    enc_bias_t = sh1[:, None] * jnp.sum(p['w_enc'], axis=0)[None, :] + p['b_enc']
    enc_bias_rows = jnp.repeat(enc_bias_t, bt, axis=0)                   # (T*bt, E)

    # ---- fold BatchNorm1d(hidden_dim) into the first decoder Linear ----
    s2 = p['bn2_gamma'] * jax.lax.rsqrt(p['bn2_var'] + EPS)              # (H,)
    sh2 = p['bn2_beta'] - p['bn2_mean'] * s2                             # (H,)
    w_d1_folded = s2[:, None] * p['w_d1']                                # (H, D1)
    b_d1_folded = p['b_d1'] + sh2[None, :] @ p['w_d1']                   # (1, D1)

    # ---- pack the four 1-row bias vectors into one slab ----
    def pad_row(v, width):
        return jnp.pad(v, ((0, 0), (0, width - v.shape[1])))
    bias_slab = jnp.concatenate([
        pad_row(p['lstm_b_l0'], D1),     # row 0: LSTM gate bias (b_ih + b_hh)
        b_d1_folded,                     # row 1: decoder bias 1 (BN2 folded in)
        pad_row(p['b_d2'], D1),          # row 2: decoder bias 2
        pad_row(p['b_d3'], D1),          # row 3: decoder bias 3 (zero-padded to lanes)
    ], axis=0).astype(f32)               # (4, D1)

    # ---- input: time-major inside each batch tile, batch padded to tile multiple ----
    xp = jnp.pad(hist.astype(f32), ((0, b_pad - bx), (0, 0), (0, 0)))    # (b_pad, T, F)
    x_tiles = (jnp.transpose(xp, (1, 0, 2))                              # (T, b_pad, F)
               .reshape(T, n_tiles, bt, F)
               .transpose(1, 0, 2, 3)
               .reshape(n_tiles, T * bt, F))                             # rows r = t*bt + b

    # ---- weights: bf16 MXU operands (f32 accumulation in-kernel) ----
    w_enc = p['w_enc'].astype(bf16)
    wih = p['lstm_wih_l0'].astype(bf16)
    whh = p['lstm_whh_l0'].astype(bf16)
    wd1 = w_d1_folded.astype(bf16)
    wd2 = p['w_d2'].astype(bf16)
    wd3 = jnp.pad(p['w_d3'], ((0, 0), (0, OUTP - OUT))).astype(bf16)     # lane-dense out

    def full(shape):                         # whole-array block, VMEM-resident across grid
        return pl.BlockSpec(shape, lambda i, _s=shape: tuple(0 for _ in _s))

    out_full = pl.pallas_call(
        fused_kernel,
        out_shape=jax.ShapeDtypeStruct((b_pad, OUTP), f32),
        grid_spec=pltpu.PrefetchScalarGridSpec(
            num_scalar_prefetch=0,
            grid=(n_tiles,),
            in_specs=[
                pl.BlockSpec((1, T * bt, F), lambda i: (i, 0, 0)),   # x batch tile
                full((T * bt, 1)),                                    # BN1 scale per row
                full((T * bt, E)),                                    # encoder bias per row
                full((F, E)),                                         # w_enc
                full((E, 4 * H)),                                     # w_ih (layer 0)
                full((H, 4 * H)),                                     # w_hh (layer 0)
                full((4, D1)),                                        # packed bias slab
                pl.BlockSpec(memory_space=pl.ANY),                    # w_d1 (manual DMA)
                pl.BlockSpec(memory_space=pl.ANY),                    # w_d2 (manual DMA)
                full((D2, OUTP)),                                     # w_d3 (padded)
            ],
            out_specs=pl.BlockSpec((bt, OUTP), lambda i: (i, 0)),
            scratch_shapes=[
                pltpu.VMEM((H, D1), bf16),        # w_d1 landing buffer
                pltpu.VMEM((D1, D2), bf16),       # w_d2 landing buffer
                pltpu.SemaphoreType.DMA((2,)),
            ]),
        compiler_params=pltpu.CompilerParams(
            dimension_semantics=("parallel",)),   # batch tiles shard across TCs (v7x)
    )(x_tiles, s1_rows, enc_bias_rows, w_enc, wih, whh, bias_slab, wd1, wd2, wd3)

    return out_full[:bx, :OUT]


# ------------------------- deterministic parameter init ---------------------
def init_params(key):
    ks = jax.random.split(key, 20)

    def w(k, shape, s=0.1):
        return jax.random.normal(k, shape, jnp.float32) * s

    p = {}
    # encoder: BatchNorm1d(seq_len) + Linear(in_dim, 64)
    p['bn1_gamma'] = 1.0 + 0.1 * jax.random.normal(ks[0], (T,), jnp.float32)
    p['bn1_beta'] = 0.1 * jax.random.normal(ks[1], (T,), jnp.float32)
    p['bn1_mean'] = 0.1 * jax.random.normal(ks[2], (T,), jnp.float32)
    p['bn1_var'] = 0.9 + 0.1 * jnp.abs(jax.random.normal(ks[3], (T,), jnp.float32))
    p['w_enc'] = w(ks[4], (F, E))
    p['b_enc'] = w(ks[5], (1, E), 0.05)

    # LSTM: PyTorch weight_ih_l{k}: (4H, in_k); stored transposed per layer.
    for l in range(L):
        in_l = E if l == 0 else H
        kk = jax.random.split(ks[6 + l], 4)
        w_ih = w(kk[0], (4 * H, in_l))
        w_hh = w(kk[1], (4 * H, H))
        b_ih = w(kk[2], (4 * H,), 0.05)
        b_hh = w(kk[3], (4 * H,), 0.05)
        p[f'lstm_wih_l{l}'] = w_ih.T                 # (in_l, 4H)
        p[f'lstm_whh_l{l}'] = w_hh.T                 # (H, 4H)
        p[f'lstm_b_l{l}'] = (b_ih + b_hh)[None, :]   # (1, 4H)

    # decoder: BatchNorm1d(H) + Linear(H,D1) + Linear(D1,D2) + Linear(D2,OUT)
    p['bn2_gamma'] = 1.0 + 0.1 * jax.random.normal(ks[10], (H,), jnp.float32)
    p['bn2_beta'] = 0.1 * jax.random.normal(ks[11], (H,), jnp.float32)
    p['bn2_mean'] = 0.1 * jax.random.normal(ks[12], (H,), jnp.float32)
    p['bn2_var'] = 0.9 + 0.1 * jnp.abs(jax.random.normal(ks[13], (H,), jnp.float32))
    p['w_d1'] = w(ks[14], (H, D1));   p['b_d1'] = w(ks[15], (1, D1), 0.05)
    p['w_d2'] = w(ks[16], (D1, D2));  p['b_d2'] = w(ks[17], (1, D2), 0.05)
    p['w_d3'] = w(ks[18], (D2, OUT)); p['b_d3'] = w(ks[19], (1, OUT), 0.05)
    return p


# ------------------------- pure-JAX reference (eval mode) -------------------
# Faithful to the PyTorch module: runs the FULL multi-layer LSTM, then consumes
# h_n[0] only — which is why the kernel can legally skip layers >= 1.
def reference_forward(hist, p):
    hp = jax.lax.Precision.HIGHEST
    bx = hist.shape[0]
    s1 = p['bn1_gamma'] / jnp.sqrt(p['bn1_var'] + EPS)
    sh1 = p['bn1_beta'] - p['bn1_mean'] * s1
    x = hist * s1[None, :, None] + sh1[None, :, None]
    enc = jax.nn.relu(jnp.einsum('btf,fe->bte', x, p['w_enc'], precision=hp)
                      + p['b_enc'][0][None, None, :])
    seq = jnp.transpose(enc, (1, 0, 2))           # (T, bx, E)
    h_n = []
    for l in range(L):
        wih = p[f'lstm_wih_l{l}']
        whh = p[f'lstm_whh_l{l}']
        b = p[f'lstm_b_l{l}']

        def step(carry, x_t, wih=wih, whh=whh, b=b):
            h, c = carry
            g = jnp.dot(x_t, wih, precision=hp) + jnp.dot(h, whh, precision=hp) + b
            i = jax.nn.sigmoid(g[:, 0:H]); f = jax.nn.sigmoid(g[:, H:2 * H])
            gg = jnp.tanh(g[:, 2 * H:3 * H]); o = jax.nn.sigmoid(g[:, 3 * H:4 * H])
            c = f * c + i * gg
            h = o * jnp.tanh(c)
            return (h, c), h

        (h_fin, _), seq = jax.lax.scan(
            step, (jnp.zeros((bx, H)), jnp.zeros((bx, H))), seq)
        h_n.append(h_fin)

    hn0 = h_n[0]   # PyTorch forward: decoder(h_n[0])
    s2 = p['bn2_gamma'] / jnp.sqrt(p['bn2_var'] + EPS)
    x = hn0 * s2[None, :] + (p['bn2_beta'] - p['bn2_mean'] * s2)[None, :]
    x = jax.nn.relu(jnp.dot(x, p['w_d1'], precision=hp) + p['b_d1'])
    x = jax.nn.relu(jnp.dot(x, p['w_d2'], precision=hp) + p['b_d2'])
    return jnp.dot(x, p['w_d3'], precision=hp) + p['b_d3']


if __name__ == "__main__":
    key = jax.random.PRNGKey(0)
    pkey, xkey = jax.random.split(key)
    params = init_params(pkey)

    # small-shape correctness check (batch=2 -> one 8-row batch tile, grid=(1,))
    hist = jax.random.normal(xkey, (B, T, F), jnp.float32)
    price = jax.block_until_ready(jax.jit(forward)(hist, params))
    ref = reference_forward(hist, params)
    np.testing.assert_allclose(np.asarray(price), np.asarray(ref),
                               rtol=2e-2, atol=2e-2)
    assert price.shape == (B, OUT)

    # batched check exercising the parallel batch-tile grid (20 rows, BT=8 -> grid=(3,))
    hist_b = jax.random.normal(jax.random.PRNGKey(1), (20, T, F), jnp.float32)
    fwd_b = jax.jit(lambda h, pp: forward(h, pp, block_b=8))
    price_b = jax.block_until_ready(fwd_b(hist_b, params))
    ref_b = reference_forward(hist_b, params)
    np.testing.assert_allclose(np.asarray(price_b), np.asarray(ref_b),
                               rtol=2e-2, atol=2e-2)

    print("KERNEL_OK")
</pallas_src>

<mosaic_0001>
module attributes {stable_mosaic.version = 11 : i64} {
  func.func @fused_kernel(%arg0: i32, %arg1: memref<1x64x16xf32, #tpu.memory_space<vmem>>, %arg2: memref<64x1xf32, #tpu.memory_space<vmem>>, %arg3: memref<64x64xf32, #tpu.memory_space<vmem>>, %arg4: memref<16x64xbf16, #tpu.memory_space<vmem>>, %arg5: memref<64x128xbf16, #tpu.memory_space<vmem>>, %arg6: memref<32x128xbf16, #tpu.memory_space<vmem>>, %arg7: memref<4x256xf32, #tpu.memory_space<vmem>>, %arg8: memref<32x256xbf16, #tpu.memory_space<any>>, %arg9: memref<256x128xbf16, #tpu.memory_space<any>>, %arg10: memref<128x128xbf16, #tpu.memory_space<vmem>>, %arg11: memref<8x128xf32, #tpu.memory_space<vmem>>, %arg12: memref<32x256xbf16, #tpu.memory_space<vmem>>, %arg13: memref<256x128xbf16, #tpu.memory_space<vmem>>, %arg14: memref<2x!tpu.dma_semaphore, #tpu.memory_space<semaphore_mem>>) attributes {dimension_semantics = [#tpu.dimension_semantics<parallel>], iteration_bounds = array<i64: 1>, scalar_prefetch = 0 : i64, scratch_operands = 3 : i64, tpu.core_type = #tpu.core_type<tc>, window_params = [{transform_indices = @transform_0, window_bounds = array<i64: 1, 64, 16>}, {pipeline_mode = #tpu.pipeline_mode<synchronous>, transform_indices = @transform_1, window_bounds = array<i64: 64, 1>}, {pipeline_mode = #tpu.pipeline_mode<synchronous>, transform_indices = @transform_2, window_bounds = array<i64: 64, 64>}, {pipeline_mode = #tpu.pipeline_mode<synchronous>, transform_indices = @transform_3, window_bounds = array<i64: 16, 64>}, {pipeline_mode = #tpu.pipeline_mode<synchronous>, transform_indices = @transform_4, window_bounds = array<i64: 64, 128>}, {pipeline_mode = #tpu.pipeline_mode<synchronous>, transform_indices = @transform_5, window_bounds = array<i64: 32, 128>}, {pipeline_mode = #tpu.pipeline_mode<synchronous>, transform_indices = @transform_6, window_bounds = array<i64: 4, 256>}, {}, {}, {pipeline_mode = #tpu.pipeline_mode<synchronous>, transform_indices = @transform_9, window_bounds = array<i64: 128, 128>}, {transform_indices = @transform_10, window_bounds = array<i64: 8, 128>}]} {
    %c0_i32 = arith.constant 0 : i32
    %0 = tpu.memref_slice %arg14[%c0_i32] : memref<2x!tpu.dma_semaphore, #tpu.memory_space<semaphore_mem>> -> memref<1x!tpu.dma_semaphore, #tpu.memory_space<semaphore_mem>>
    %1 = tpu.memref_squeeze %0 : memref<1x!tpu.dma_semaphore, #tpu.memory_space<semaphore_mem>> -> memref<!tpu.dma_semaphore, #tpu.memory_space<semaphore_mem>>
    tpu.enqueue_dma source(%arg8 : memref<32x256xbf16, #tpu.memory_space<any>>) target(%arg12 : memref<32x256xbf16, #tpu.memory_space<vmem>>) target_semaphore(%1 : memref<!tpu.dma_semaphore, #tpu.memory_space<semaphore_mem>>)
    %c1_i32 = arith.constant 1 : i32
    %2 = tpu.memref_slice %arg14[%c1_i32] : memref<2x!tpu.dma_semaphore, #tpu.memory_space<semaphore_mem>> -> memref<1x!tpu.dma_semaphore, #tpu.memory_space<semaphore_mem>>
    %3 = tpu.memref_squeeze %2 : memref<1x!tpu.dma_semaphore, #tpu.memory_space<semaphore_mem>> -> memref<!tpu.dma_semaphore, #tpu.memory_space<semaphore_mem>>
    tpu.enqueue_dma source(%arg9 : memref<256x128xbf16, #tpu.memory_space<any>>) target(%arg13 : memref<256x128xbf16, #tpu.memory_space<vmem>>) target_semaphore(%3 : memref<!tpu.dma_semaphore, #tpu.memory_space<semaphore_mem>>)
    %c0 = arith.constant 0 : index
    %c0_0 = arith.constant 0 : index
    %4 = vector.load %arg7[%c0, %c0_0] : memref<4x256xf32, #tpu.memory_space<vmem>>, vector<4x256xf32>
    %5 = vector.extract_strided_slice %4 {offsets = [0, 0], sizes = [1, 128], strides = [1, 1]} : vector<4x256xf32> to vector<1x128xf32>
    %6 = vector.extract_strided_slice %4 {offsets = [1, 0], sizes = [1, 256], strides = [1, 1]} : vector<4x256xf32> to vector<1x256xf32>
    %7 = vector.extract_strided_slice %4 {offsets = [2, 0], sizes = [1, 128], strides = [1, 1]} : vector<4x256xf32> to vector<1x128xf32>
    %8 = vector.extract_strided_slice %4 {offsets = [3, 0], sizes = [1, 128], strides = [1, 1]} : vector<4x256xf32> to vector<1x128xf32>
    %c0_1 = arith.constant 0 : index
    %c0_2 = arith.constant 0 : index
    %c0_3 = arith.constant 0 : index
    %9 = vector.load %arg1[%c0_1, %c0_2, %c0_3] : memref<1x64x16xf32, #tpu.memory_space<vmem>>, vector<1x64x16xf32>
    %10 = vector.shape_cast %9 : vector<1x64x16xf32> to vector<64x16xf32>
    %c0_4 = arith.constant 0 : index
    %c0_5 = arith.constant 0 : index
    %11 = vector.load %arg2[%c0_4, %c0_5] : memref<64x1xf32, #tpu.memory_space<vmem>>, vector<64x1xf32>
    %12 = vector.broadcast %11 : vector<64x1xf32> to vector<64x16xf32>
    %13 = arith.mulf %10, %12 : vector<64x16xf32>
    %14 = arith.truncf %13 : vector<64x16xf32> to vector<64x16xbf16>
    %c0_6 = arith.constant 0 : index
    %c0_7 = arith.constant 0 : index
    %15 = vector.load %arg4[%c0_6, %c0_7] : memref<16x64xbf16, #tpu.memory_space<vmem>>, vector<16x64xbf16>
    %cst = arith.constant dense<0.000000e+00> : vector<64x64xf32>
    %16 = tpu.matmul %14, %15, %cst {dimension_numbers = #tpu.dot_dimension_numbers<[1], [0], [0], [1], [0, 0, 1, 1], [], []>} : vector<64x16xbf16>, vector<16x64xbf16>, vector<64x64xf32> -> vector<64x64xf32>
    %c0_8 = arith.constant 0 : index
    %c0_9 = arith.constant 0 : index
    %17 = vector.load %arg3[%c0_8, %c0_9] : memref<64x64xf32, #tpu.memory_space<vmem>>, vector<64x64xf32>
    %18 = arith.addf %16, %17 : vector<64x64xf32>
    %cst_10 = arith.constant 0.000000e+00 : f32
    %19 = vector.broadcast %cst_10 : f32 to vector<64x64xf32>
    %20 = arith.maximumf %18, %19 : vector<64x64xf32>
    %21 = arith.truncf %20 : vector<64x64xf32> to vector<64x64xbf16>
    %c0_11 = arith.constant 0 : index
    %c0_12 = arith.constant 0 : index
    %22 = vector.load %arg5[%c0_11, %c0_12] : memref<64x128xbf16, #tpu.memory_space<vmem>>, vector<64x128xbf16>
    %cst_13 = arith.constant dense<0.000000e+00> : vector<64x128xf32>
    %23 = tpu.matmul %21, %22, %cst_13 {dimension_numbers = #tpu.dot_dimension_numbers<[1], [0], [0], [1], [0, 0, 1, 1], [], []>} : vector<64x64xbf16>, vector<64x128xbf16>, vector<64x128xf32> -> vector<64x128xf32>
    %24 = vector.broadcast %5 : vector<1x128xf32> to vector<64x128xf32>
    %25 = arith.addf %23, %24 : vector<64x128xf32>
    %c0_14 = arith.constant 0 : index
    %c0_15 = arith.constant 0 : index
    %26 = vector.load %arg6[%c0_14, %c0_15] : memref<32x128xbf16, #tpu.memory_space<vmem>>, vector<32x128xbf16>
    %27 = tpu.iota {dimensions = array<i32: 1>} : vector<8x128xi32>
    %c64_i32 = arith.constant 64 : i32
    %28 = vector.broadcast %c64_i32 : i32 to vector<8x128xi32>
    %29 = arith.cmpi sge, %27, %28 : vector<8x128xi32>
    %c96_i32 = arith.constant 96 : i32
    %30 = vector.broadcast %c96_i32 : i32 to vector<8x128xi32>
    %31 = arith.cmpi slt, %27, %30 : vector<8x128xi32>
    %32 = arith.andi %29, %31 : vector<8x128xi1>
    %cst_16 = arith.constant 0.000000e+00 : f32
    %33 = vector.broadcast %cst_16 : f32 to vector<8x32xf32>
    %34 = vector.extract_strided_slice %25 {offsets = [0, 0], sizes = [8, 128], strides = [1, 1]} : vector<64x128xf32> to vector<8x128xf32>
    %cst_17 = arith.constant 5.000000e-01 : f32
    %35 = vector.broadcast %cst_17 : f32 to vector<8x128xf32>
    %36 = arith.mulf %35, %34 : vector<8x128xf32>
    %37 = arith.select %32, %34, %36 : vector<8x128xi1>, vector<8x128xf32>
    %38 = math.tanh %37 : vector<8x128xf32>
    %cst_18 = arith.constant 5.000000e-01 : f32
    %39 = vector.broadcast %cst_18 : f32 to vector<8x128xf32>
    %40 = arith.mulf %39, %38 : vector<8x128xf32>
    %cst_19 = arith.constant 5.000000e-01 : f32
    %41 = vector.broadcast %cst_19 : f32 to vector<8x128xf32>
    %42 = arith.addf %40, %41 : vector<8x128xf32>
    %43 = arith.select %32, %38, %42 : vector<8x128xi1>, vector<8x128xf32>
    %44 = vector.extract_strided_slice %43 {offsets = [0, 0], sizes = [8, 32], strides = [1, 1]} : vector<8x128xf32> to vector<8x32xf32>
    %45 = vector.extract_strided_slice %43 {offsets = [0, 32], sizes = [8, 32], strides = [1, 1]} : vector<8x128xf32> to vector<8x32xf32>
    %46 = vector.extract_strided_slice %43 {offsets = [0, 64], sizes = [8, 32], strides = [1, 1]} : vector<8x128xf32> to vector<8x32xf32>
    %47 = vector.extract_strided_slice %43 {offsets = [0, 96], sizes = [8, 32], strides = [1, 1]} : vector<8x128xf32> to vector<8x32xf32>
    %48 = arith.mulf %45, %33 : vector<8x32xf32>
    %49 = arith.mulf %44, %46 : vector<8x32xf32>
    %50 = arith.addf %48, %49 : vector<8x32xf32>
    %51 = math.tanh %50 : vector<8x32xf32>
    %52 = arith.mulf %47, %51 : vector<8x32xf32>
    %53 = vector.extract_strided_slice %25 {offsets = [8, 0], sizes = [8, 128], strides = [1, 1]} : vector<64x128xf32> to vector<8x128xf32>
    %54 = arith.truncf %52 : vector<8x32xf32> to vector<8x32xbf16>
    %cst_20 = arith.constant dense<0.000000e+00> : vector<8x128xf32>
    %55 = tpu.matmul %54, %26, %cst_20 {dimension_numbers = #tpu.dot_dimension_numbers<[1], [0], [0], [1], [0, 0, 1, 1], [], []>} : vector<8x32xbf16>, vector<32x128xbf16>, vector<8x128xf32> -> vector<8x128xf32>
    %56 = arith.addf %53, %55 : vector<8x128xf32>
    %cst_21 = arith.constant 5.000000e-01 : f32
    %57 = vector.broadcast %cst_21 : f32 to vector<8x128xf32>
    %58 = arith.mulf %57, %56 : vector<8x128xf32>
    %59 = arith.select %32, %56, %58 : vector<8x128xi1>, vector<8x128xf32>
    %60 = math.tanh %59 : vector<8x128xf32>
    %cst_22 = arith.constant 5.000000e-01 : f32
    %61 = vector.broadcast %cst_22 : f32 to vector<8x128xf32>
    %62 = arith.mulf %61, %60 : vector<8x128xf32>
    %cst_23 = arith.constant 5.000000e-01 : f32
    %63 = vector.broadcast %cst_23 : f32 to vector<8x128xf32>
    %64 = arith.addf %62, %63 : vector<8x128xf32>
    %65 = arith.select %32, %60, %64 : vector<8x128xi1>, vector<8x128xf32>
    %66 = vector.extract_strided_slice %65 {offsets = [0, 0], sizes = [8, 32], strides = [1, 1]} : vector<8x128xf32> to vector<8x32xf32>
    %67 = vector.extract_strided_slice %65 {offsets = [0, 32], sizes = [8, 32], strides = [1, 1]} : vector<8x128xf32> to vector<8x32xf32>
    %68 = vector.extract_strided_slice %65 {offsets = [0, 64], sizes = [8, 32], strides = [1, 1]} : vector<8x128xf32> to vector<8x32xf32>
    %69 = vector.extract_strided_slice %65 {offsets = [0, 96], sizes = [8, 32], strides = [1, 1]} : vector<8x128xf32> to vector<8x32xf32>
    %70 = arith.mulf %67, %50 : vector<8x32xf32>
    %71 = arith.mulf %66, %68 : vector<8x32xf32>
    %72 = arith.addf %70, %71 : vector<8x32xf32>
    %73 = math.tanh %72 : vector<8x32xf32>
    %74 = arith.mulf %69, %73 : vector<8x32xf32>
    %75 = vector.extract_strided_slice %25 {offsets = [16, 0], sizes = [8, 128], strides = [1, 1]} : vector<64x128xf32> to vector<8x128xf32>
    %76 = arith.truncf %74 : vector<8x32xf32> to vector<8x32xbf16>
    %cst_24 = arith.constant dense<0.000000e+00> : vector<8x128xf32>
    %77 = tpu.matmul %76, %26, %cst_24 {dimension_numbers = #tpu.dot_dimension_numbers<[1], [0], [0], [1], [0, 0, 1, 1], [], []>} : vector<8x32xbf16>, vector<32x128xbf16>, vector<8x128xf32> -> vector<8x128xf32>
    %78 = arith.addf %75, %77 : vector<8x128xf32>
    %cst_25 = arith.constant 5.000000e-01 : f32
    %79 = vector.broadcast %cst_25 : f32 to vector<8x128xf32>
    %80 = arith.mulf %79, %78 : vector<8x128xf32>
    %81 = arith.select %32, %78, %80 : vector<8x128xi1>, vector<8x128xf32>
    %82 = math.tanh %81 : vector<8x128xf32>
    %cst_26 = arith.constant 5.000000e-01 : f32
    %83 = vector.broadcast %cst_26 : f32 to vector<8x128xf32>
    %84 = arith.mulf %83, %82 : vector<8x128xf32>
    %cst_27 = arith.constant 5.000000e-01 : f32
    %85 = vector.broadcast %cst_27 : f32 to vector<8x128xf32>
    %86 = arith.addf %84, %85 : vector<8x128xf32>
    %87 = arith.select %32, %82, %86 : vector<8x128xi1>, vector<8x128xf32>
    %88 = vector.extract_strided_slice %87 {offsets = [0, 0], sizes = [8, 32], strides = [1, 1]} : vector<8x128xf32> to vector<8x32xf32>
    %89 = vector.extract_strided_slice %87 {offsets = [0, 32], sizes = [8, 32], strides = [1, 1]} : vector<8x128xf32> to vector<8x32xf32>
    %90 = vector.extract_strided_slice %87 {offsets = [0, 64], sizes = [8, 32], strides = [1, 1]} : vector<8x128xf32> to vector<8x32xf32>
    %91 = vector.extract_strided_slice %87 {offsets = [0, 96], sizes = [8, 32], strides = [1, 1]} : vector<8x128xf32> to vector<8x32xf32>
    %92 = arith.mulf %89, %72 : vector<8x32xf32>
    %93 = arith.mulf %88, %90 : vector<8x32xf32>
    %94 = arith.addf %92, %93 : vector<8x32xf32>
    %95 = math.tanh %94 : vector<8x32xf32>
    %96 = arith.mulf %91, %95 : vector<8x32xf32>
    %97 = vector.extract_strided_slice %25 {offsets = [24, 0], sizes = [8, 128], strides = [1, 1]} : vector<64x128xf32> to vector<8x128xf32>
    %98 = arith.truncf %96 : vector<8x32xf32> to vector<8x32xbf16>
    %cst_28 = arith.constant dense<0.000000e+00> : vector<8x128xf32>
    %99 = tpu.matmul %98, %26, %cst_28 {dimension_numbers = #tpu.dot_dimension_numbers<[1], [0], [0], [1], [0, 0, 1, 1], [], []>} : vector<8x32xbf16>, vector<32x128xbf16>, vector<8x128xf32> -> vector<8x128xf32>
    %100 = arith.addf %97, %99 : vector<8x128xf32>
    %cst_29 = arith.constant 5.000000e-01 : f32
    %101 = vector.broadcast %cst_29 : f32 to vector<8x128xf32>
    %102 = arith.mulf %101, %100 : vector<8x128xf32>
    %103 = arith.select %32, %100, %102 : vector<8x128xi1>, vector<8x128xf32>
    %104 = math.tanh %103 : vector<8x128xf32>
    %cst_30 = arith.constant 5.000000e-01 : f32
    %105 = vector.broadcast %cst_30 : f32 to vector<8x128xf32>
    %106 = arith.mulf %105, %104 : vector<8x128xf32>
    %cst_31 = arith.constant 5.000000e-01 : f32
    %107 = vector.broadcast %cst_31 : f32 to vector<8x128xf32>
    %108 = arith.addf %106, %107 : vector<8x128xf32>
    %109 = arith.select %32, %104, %108 : vector<8x128xi1>, vector<8x128xf32>
    %110 = vector.extract_strided_slice %109 {offsets = [0, 0], sizes = [8, 32], strides = [1, 1]} : vector<8x128xf32> to vector<8x32xf32>
    %111 = vector.extract_strided_slice %109 {offsets = [0, 32], sizes = [8, 32], strides = [1, 1]} : vector<8x128xf32> to vector<8x32xf32>
    %112 = vector.extract_strided_slice %109 {offsets = [0, 64], sizes = [8, 32], strides = [1, 1]} : vector<8x128xf32> to vector<8x32xf32>
    %113 = vector.extract_strided_slice %109 {offsets = [0, 96], sizes = [8, 32], strides = [1, 1]} : vector<8x128xf32> to vector<8x32xf32>
    %114 = arith.mulf %111, %94 : vector<8x32xf32>
    %115 = arith.mulf %110, %112 : vector<8x32xf32>
    %116 = arith.addf %114, %115 : vector<8x32xf32>
    %117 = math.tanh %116 : vector<8x32xf32>
    %118 = arith.mulf %113, %117 : vector<8x32xf32>
    %119 = vector.extract_strided_slice %25 {offsets = [32, 0], sizes = [8, 128], strides = [1, 1]} : vector<64x128xf32> to vector<8x128xf32>
    %120 = arith.truncf %118 : vector<8x32xf32> to vector<8x32xbf16>
    %cst_32 = arith.constant dense<0.000000e+00> : vector<8x128xf32>
    %121 = tpu.matmul %120, %26, %cst_32 {dimension_numbers = #tpu.dot_dimension_numbers<[1], [0], [0], [1], [0, 0, 1, 1], [], []>} : vector<8x32xbf16>, vector<32x128xbf16>, vector<8x128xf32> -> vector<8x128xf32>
    %122 = arith.addf %119, %121 : vector<8x128xf32>
    %cst_33 = arith.constant 5.000000e-01 : f32
    %123 = vector.broadcast %cst_33 : f32 to vector<8x128xf32>
    %124 = arith.mulf %123, %122 : vector<8x128xf32>
    %125 = arith.select %32, %122, %124 : vector<8x128xi1>, vector<8x128xf32>
    %126 = math.tanh %125 : vector<8x128xf32>
    %cst_34 = arith.constant 5.000000e-01 : f32
    %127 = vector.broadcast %cst_34 : f32 to vector<8x128xf32>
    %128 = arith.mulf %127, %126 : vector<8x128xf32>
    %cst_35 = arith.constant 5.000000e-01 : f32
    %129 = vector.broadcast %cst_35 : f32 to vector<8x128xf32>
    %130 = arith.addf %128, %129 : vector<8x128xf32>
    %131 = arith.select %32, %126, %130 : vector<8x128xi1>, vector<8x128xf32>
    %132 = vector.extract_strided_slice %131 {offsets = [0, 0], sizes = [8, 32], strides = [1, 1]} : vector<8x128xf32> to vector<8x32xf32>
    %133 = vector.extract_strided_slice %131 {offsets = [0, 32], sizes = [8, 32], strides = [1, 1]} : vector<8x128xf32> to vector<8x32xf32>
    %134 = vector.extract_strided_slice %131 {offsets = [0, 64], sizes = [8, 32], strides = [1, 1]} : vector<8x128xf32> to vector<8x32xf32>
    %135 = vector.extract_strided_slice %131 {offsets = [0, 96], sizes = [8, 32], strides = [1, 1]} : vector<8x128xf32> to vector<8x32xf32>
    %136 = arith.mulf %133, %116 : vector<8x32xf32>
    %137 = arith.mulf %132, %134 : vector<8x32xf32>
    %138 = arith.addf %136, %137 : vector<8x32xf32>
    %139 = math.tanh %138 : vector<8x32xf32>
    %140 = arith.mulf %135, %139 : vector<8x32xf32>
    %141 = vector.extract_strided_slice %25 {offsets = [40, 0], sizes = [8, 128], strides = [1, 1]} : vector<64x128xf32> to vector<8x128xf32>
    %142 = arith.truncf %140 : vector<8x32xf32> to vector<8x32xbf16>
    %cst_36 = arith.constant dense<0.000000e+00> : vector<8x128xf32>
    %143 = tpu.matmul %142, %26, %cst_36 {dimension_numbers = #tpu.dot_dimension_numbers<[1], [0], [0], [1], [0, 0, 1, 1], [], []>} : vector<8x32xbf16>, vector<32x128xbf16>, vector<8x128xf32> -> vector<8x128xf32>
    %144 = arith.addf %141, %143 : vector<8x128xf32>
    %cst_37 = arith.constant 5.000000e-01 : f32
    %145 = vector.broadcast %cst_37 : f32 to vector<8x128xf32>
    %146 = arith.mulf %145, %144 : vector<8x128xf32>
    %147 = arith.select %32, %144, %146 : vector<8x128xi1>, vector<8x128xf32>
    %148 = math.tanh %147 : vector<8x128xf32>
    %cst_38 = arith.constant 5.000000e-01 : f32
    %149 = vector.broadcast %cst_38 : f32 to vector<8x128xf32>
    %150 = arith.mulf %149, %148 : vector<8x128xf32>
    %cst_39 = arith.constant 5.000000e-01 : f32
    %151 = vector.broadcast %cst_39 : f32 to vector<8x128xf32>
    %152 = arith.addf %150, %151 : vector<8x128xf32>
    %153 = arith.select %32, %148, %152 : vector<8x128xi1>, vector<8x128xf32>
    %154 = vector.extract_strided_slice %153 {offsets = [0, 0], sizes = [8, 32], strides = [1, 1]} : vector<8x128xf32> to vector<8x32xf32>
    %155 = vector.extract_strided_slice %153 {offsets = [0, 32], sizes = [8, 32], strides = [1, 1]} : vector<8x128xf32> to vector<8x32xf32>
    %156 = vector.extract_strided_slice %153 {offsets = [0, 64], sizes = [8, 32], strides = [1, 1]} : vector<8x128xf32> to vector<8x32xf32>
    %157 = vector.extract_strided_slice %153 {offsets = [0, 96], sizes = [8, 32], strides = [1, 1]} : vector<8x128xf32> to vector<8x32xf32>
    %158 = arith.mulf %155, %138 : vector<8x32xf32>
    %159 = arith.mulf %154, %156 : vector<8x32xf32>
    %160 = arith.addf %158, %159 : vector<8x32xf32>
    %161 = math.tanh %160 : vector<8x32xf32>
    %162 = arith.mulf %157, %161 : vector<8x32xf32>
    %163 = vector.extract_strided_slice %25 {offsets = [48, 0], sizes = [8, 128], strides = [1, 1]} : vector<64x128xf32> to vector<8x128xf32>
    %164 = arith.truncf %162 : vector<8x32xf32> to vector<8x32xbf16>
    %cst_40 = arith.constant dense<0.000000e+00> : vector<8x128xf32>
    %165 = tpu.matmul %164, %26, %cst_40 {dimension_numbers = #tpu.dot_dimension_numbers<[1], [0], [0], [1], [0, 0, 1, 1], [], []>} : vector<8x32xbf16>, vector<32x128xbf16>, vector<8x128xf32> -> vector<8x128xf32>
    %166 = arith.addf %163, %165 : vector<8x128xf32>
    %cst_41 = arith.constant 5.000000e-01 : f32
    %167 = vector.broadcast %cst_41 : f32 to vector<8x128xf32>
    %168 = arith.mulf %167, %166 : vector<8x128xf32>
    %169 = arith.select %32, %166, %168 : vector<8x128xi1>, vector<8x128xf32>
    %170 = math.tanh %169 : vector<8x128xf32>
    %cst_42 = arith.constant 5.000000e-01 : f32
    %171 = vector.broadcast %cst_42 : f32 to vector<8x128xf32>
    %172 = arith.mulf %171, %170 : vector<8x128xf32>
    %cst_43 = arith.constant 5.000000e-01 : f32
    %173 = vector.broadcast %cst_43 : f32 to vector<8x128xf32>
    %174 = arith.addf %172, %173 : vector<8x128xf32>
    %175 = arith.select %32, %170, %174 : vector<8x128xi1>, vector<8x128xf32>
    %176 = vector.extract_strided_slice %175 {offsets = [0, 0], sizes = [8, 32], strides = [1, 1]} : vector<8x128xf32> to vector<8x32xf32>
    %177 = vector.extract_strided_slice %175 {offsets = [0, 32], sizes = [8, 32], strides = [1, 1]} : vector<8x128xf32> to vector<8x32xf32>
    %178 = vector.extract_strided_slice %175 {offsets = [0, 64], sizes = [8, 32], strides = [1, 1]} : vector<8x128xf32> to vector<8x32xf32>
    %179 = vector.extract_strided_slice %175 {offsets = [0, 96], sizes = [8, 32], strides = [1, 1]} : vector<8x128xf32> to vector<8x32xf32>
    %180 = arith.mulf %177, %160 : vector<8x32xf32>
    %181 = arith.mulf %176, %178 : vector<8x32xf32>
    %182 = arith.addf %180, %181 : vector<8x32xf32>
    %183 = math.tanh %182 : vector<8x32xf32>
    %184 = arith.mulf %179, %183 : vector<8x32xf32>
    %185 = vector.extract_strided_slice %25 {offsets = [56, 0], sizes = [8, 128], strides = [1, 1]} : vector<64x128xf32> to vector<8x128xf32>
    %186 = arith.truncf %184 : vector<8x32xf32> to vector<8x32xbf16>
    %cst_44 = arith.constant dense<0.000000e+00> : vector<8x128xf32>
    %187 = tpu.matmul %186, %26, %cst_44 {dimension_numbers = #tpu.dot_dimension_numbers<[1], [0], [0], [1], [0, 0, 1, 1], [], []>} : vector<8x32xbf16>, vector<32x128xbf16>, vector<8x128xf32> -> vector<8x128xf32>
    %188 = arith.addf %185, %187 : vector<8x128xf32>
    %cst_45 = arith.constant 5.000000e-01 : f32
    %189 = vector.broadcast %cst_45 : f32 to vector<8x128xf32>
    %190 = arith.mulf %189, %188 : vector<8x128xf32>
    %191 = arith.select %32, %188, %190 : vector<8x128xi1>, vector<8x128xf32>
    %192 = math.tanh %191 : vector<8x128xf32>
    %cst_46 = arith.constant 5.000000e-01 : f32
    %193 = vector.broadcast %cst_46 : f32 to vector<8x128xf32>
    %194 = arith.mulf %193, %192 : vector<8x128xf32>
    %cst_47 = arith.constant 5.000000e-01 : f32
    %195 = vector.broadcast %cst_47 : f32 to vector<8x128xf32>
    %196 = arith.addf %194, %195 : vector<8x128xf32>
    %197 = arith.select %32, %192, %196 : vector<8x128xi1>, vector<8x128xf32>
    %198 = vector.extract_strided_slice %197 {offsets = [0, 0], sizes = [8, 32], strides = [1, 1]} : vector<8x128xf32> to vector<8x32xf32>
    %199 = vector.extract_strided_slice %197 {offsets = [0, 32], sizes = [8, 32], strides = [1, 1]} : vector<8x128xf32> to vector<8x32xf32>
    %200 = vector.extract_strided_slice %197 {offsets = [0, 64], sizes = [8, 32], strides = [1, 1]} : vector<8x128xf32> to vector<8x32xf32>
    %201 = vector.extract_strided_slice %197 {offsets = [0, 96], sizes = [8, 32], strides = [1, 1]} : vector<8x128xf32> to vector<8x32xf32>
    %202 = arith.mulf %199, %182 : vector<8x32xf32>
    %203 = arith.mulf %198, %200 : vector<8x32xf32>
    %204 = arith.addf %202, %203 : vector<8x32xf32>
    %205 = math.tanh %204 : vector<8x32xf32>
    %206 = arith.mulf %201, %205 : vector<8x32xf32>
    %c0_i32_48 = arith.constant 0 : i32
    %207 = tpu.memref_slice %arg14[%c0_i32_48] : memref<2x!tpu.dma_semaphore, #tpu.memory_space<semaphore_mem>> -> memref<1x!tpu.dma_semaphore, #tpu.memory_space<semaphore_mem>>
    %208 = tpu.memref_squeeze %207 : memref<1x!tpu.dma_semaphore, #tpu.memory_space<semaphore_mem>> -> memref<!tpu.dma_semaphore, #tpu.memory_space<semaphore_mem>>
    tpu.wait_dma2 semaphore(%208 : memref<!tpu.dma_semaphore, #tpu.memory_space<semaphore_mem>>) src(%arg8 : memref<32x256xbf16, #tpu.memory_space<any>>) dst(%arg12 : memref<32x256xbf16, #tpu.memory_space<vmem>>)
    %c1_i32_49 = arith.constant 1 : i32
    %209 = tpu.memref_slice %arg14[%c1_i32_49] : memref<2x!tpu.dma_semaphore, #tpu.memory_space<semaphore_mem>> -> memref<1x!tpu.dma_semaphore, #tpu.memory_space<semaphore_mem>>
    %210 = tpu.memref_squeeze %209 : memref<1x!tpu.dma_semaphore, #tpu.memory_space<semaphore_mem>> -> memref<!tpu.dma_semaphore, #tpu.memory_space<semaphore_mem>>
    tpu.wait_dma2 semaphore(%210 : memref<!tpu.dma_semaphore, #tpu.memory_space<semaphore_mem>>) src(%arg9 : memref<256x128xbf16, #tpu.memory_space<any>>) dst(%arg13 : memref<256x128xbf16, #tpu.memory_space<vmem>>)
    %211 = arith.truncf %206 : vector<8x32xf32> to vector<8x32xbf16>
    %c0_50 = arith.constant 0 : index
    %c0_51 = arith.constant 0 : index
    %212 = vector.load %arg12[%c0_50, %c0_51] : memref<32x256xbf16, #tpu.memory_space<vmem>>, vector<32x256xbf16>
    %cst_52 = arith.constant dense<0.000000e+00> : vector<8x256xf32>
    %213 = tpu.matmul %211, %212, %cst_52 {dimension_numbers = #tpu.dot_dimension_numbers<[1], [0], [0], [1], [0, 0, 1, 1], [], []>} : vector<8x32xbf16>, vector<32x256xbf16>, vector<8x256xf32> -> vector<8x256xf32>
    %214 = vector.broadcast %6 : vector<1x256xf32> to vector<8x256xf32>
    %215 = arith.addf %213, %214 : vector<8x256xf32>
    %cst_53 = arith.constant 0.000000e+00 : f32
    %216 = vector.broadcast %cst_53 : f32 to vector<8x256xf32>
    %217 = arith.maximumf %215, %216 : vector<8x256xf32>
    %218 = arith.truncf %217 : vector<8x256xf32> to vector<8x256xbf16>
    %c0_54 = arith.constant 0 : index
    %c0_55 = arith.constant 0 : index
    %219 = vector.load %arg13[%c0_54, %c0_55] : memref<256x128xbf16, #tpu.memory_space<vmem>>, vector<256x128xbf16>
    %cst_56 = arith.constant dense<0.000000e+00> : vector<8x128xf32>
    %220 = tpu.matmul %218, %219, %cst_56 {dimension_numbers = #tpu.dot_dimension_numbers<[1], [0], [0], [1], [0, 0, 1, 1], [], []>} : vector<8x256xbf16>, vector<256x128xbf16>, vector<8x128xf32> -> vector<8x128xf32>
    %221 = vector.broadcast %7 : vector<1x128xf32> to vector<8x128xf32>
    %222 = arith.addf %220, %221 : vector<8x128xf32>
    %cst_57 = arith.constant 0.000000e+00 : f32
    %223 = vector.broadcast %cst_57 : f32 to vector<8x128xf32>
    %224 = arith.maximumf %222, %223 : vector<8x128xf32>
    %225 = arith.truncf %224 : vector<8x128xf32> to vector<8x128xbf16>
    %c0_58 = arith.constant 0 : index
    %c0_59 = arith.constant 0 : index
    %226 = vector.load %arg10[%c0_58, %c0_59] : memref<128x128xbf16, #tpu.memory_space<vmem>>, vector<128x128xbf16>
    %cst_60 = arith.constant dense<0.000000e+00> : vector<8x128xf32>
    %227 = tpu.matmul %225, %226, %cst_60 {dimension_numbers = #tpu.dot_dimension_numbers<[1], [0], [0], [1], [0, 0, 1, 1], [], []>} : vector<8x128xbf16>, vector<128x128xbf16>, vector<8x128xf32> -> vector<8x128xf32>
    %228 = vector.broadcast %8 : vector<1x128xf32> to vector<8x128xf32>
    %229 = arith.addf %227, %228 : vector<8x128xf32>
    %c0_61 = arith.constant 0 : index
    %c0_62 = arith.constant 0 : index
    %230 = vector.load %arg11[%c0_61, %c0_62] : memref<8x128xf32, #tpu.memory_space<vmem>>, vector<8x128xf32>
    tpu.vector_store %arg11[%c0_61, %c0_62], %229 {strides = array<i32>} : memref<8x128xf32, #tpu.memory_space<vmem>>, vector<8x128xf32>,
    return
  }
  func.func @transform_0(%arg0: i32) -> (i32, i32, i32) {
    %c0_i32 = arith.constant 0 : i32
    %c0_i32_0 = arith.constant 0 : i32
    %c0_i32_1 = arith.constant 0 : i32
    return %arg0, %c0_i32, %c0_i32_0 : i32, i32, i32
  }
  func.func @transform_1(%arg0: i32) -> (i32, i32) {
    %c0_i32 = arith.constant 0 : i32
    %c0_i32_0 = arith.constant 0 : i32
    %c0_i32_1 = arith.constant 0 : i32
    return %c0_i32, %c0_i32_0 : i32, i32
  }
  func.func @transform_2(%arg0: i32) -> (i32, i32) {
    %c0_i32 = arith.constant 0 : i32
    %c0_i32_0 = arith.constant 0 : i32
    %c0_i32_1 = arith.constant 0 : i32
    return %c0_i32, %c0_i32_0 : i32, i32
  }
  func.func @transform_3(%arg0: i32) -> (i32, i32) {
    %c0_i32 = arith.constant 0 : i32
    %c0_i32_0 = arith.constant 0 : i32
    %c0_i32_1 = arith.constant 0 : i32
    return %c0_i32, %c0_i32_0 : i32, i32
  }
  func.func @transform_4(%arg0: i32) -> (i32, i32) {
    %c0_i32 = arith.constant 0 : i32
    %c0_i32_0 = arith.constant 0 : i32
    %c0_i32_1 = arith.constant 0 : i32
    return %c0_i32, %c0_i32_0 : i32, i32
  }
  func.func @transform_5(%arg0: i32) -> (i32, i32) {
    %c0_i32 = arith.constant 0 : i32
    %c0_i32_0 = arith.constant 0 : i32
    %c0_i32_1 = arith.constant 0 : i32
    return %c0_i32, %c0_i32_0 : i32, i32
  }
  func.func @transform_6(%arg0: i32) -> (i32, i32) {
    %c0_i32 = arith.constant 0 : i32
    %c0_i32_0 = arith.constant 0 : i32
    %c0_i32_1 = arith.constant 0 : i32
    return %c0_i32, %c0_i32_0 : i32, i32
  }
  func.func @transform_9(%arg0: i32) -> (i32, i32) {
    %c0_i32 = arith.constant 0 : i32
    %c0_i32_0 = arith.constant 0 : i32
    %c0_i32_1 = arith.constant 0 : i32
    return %c0_i32, %c0_i32_0 : i32, i32
  }
  func.func @transform_10(%arg0: i32) -> (i32, i32) {
    %c0_i32 = arith.constant 0 : i32
    %c0_i32_0 = arith.constant 0 : i32
    return %arg0, %c0_i32 : i32, i32
  }
}

</mosaic_0001>

<llo_original>
// kernel: forward.1
$region0: #{forward.1}
  #allocation0 [shape = 'u32[]', space=smem, size = 0x4, offset = 0x4, fixed_abs, tag = 'smem constant byte address 0x4 - core index']
  #allocation1 [shape = 'u32[144,128]{1,0:T(1,128)}', space=vmem, size = 0x12000, scoped, tag = 'internal scratch']
  #allocation2 [shape = 'bf16[32,256]{1,0:T(8,128)(2,1)}', space=vmem, size = 0x4000, scoped, tag = 'scratch operand']
  #allocation3 [shape = 'bf16[256,128]{1,0:T(8,128)(2,1)}', space=vmem, size = 0x10000, scoped, tag = 'scratch operand']
  #allocation4 [shape = 's32[2]{0}', space=sflag, size = 0x8, scoped, tag = 'scratch operand']
  #allocation5 [shape = 's32[]', space=sflag, size = 0x4, offset = 0, fixed_abs, tag = 'sflag constant byte address 0x0 - dummy sync flag']
  #allocation6 [shape = 's32[]', space=sflag, size = 0x4, offset = 0, fixed_abs, tag = 'sflag constant byte address 0x0 - dummy sync flag']
  %s0 = inlined_call_operand.vmem [shape: f32[1,64,16], index: 0, kind: input, shape index: {}]
  %s1 = inlined_call_operand.vmem [shape: f32[64,1], index: 1, kind: input, shape index: {}]
  %s2 = inlined_call_operand.vmem [shape: f32[64,64], index: 2, kind: input, shape index: {}]
  %s3 = inlined_call_operand.vmem [shape: bf16[16,64], index: 3, kind: input, shape index: {}]
  %s4 = inlined_call_operand.vmem [shape: bf16[64,128], index: 4, kind: input, shape index: {}]
  %s5 = inlined_call_operand.vmem [shape: bf16[32,128], index: 5, kind: input, shape index: {}]
  %s6 = inlined_call_operand.vmem [shape: f32[4,256], index: 6, kind: input, shape index: {}]
  %s7 = inlined_call_operand.vmem [shape: bf16[32,256], index: 7, kind: input, shape index: {}]
  %s8 = inlined_call_operand.vmem [shape: bf16[256,128], index: 8, kind: input, shape index: {}]
  %s9 = inlined_call_operand.vmem [shape: bf16[128,128], index: 9, kind: input, shape index: {}]
  %s10 = inlined_call_operand.vmem [shape: f32[8,128], index: 10, kind: output, shape index: {}]
  %s11 = sld [smem:[#allocation0]]
  $region110: #{forward.1} parent=0
    _
  %s13 = ssub.s32 1, %s11
  %s14 = scalar_select 0, %s13, %s11
  // Predicated region
  $region2: #{forward.1} parent=0 // pred_check
    _
  $region3: #{forward.1} parent=0 // pred_check_branch
    %16 = sbr.rel (0) target = $region5
  $region4: #{forward.1} parent=0 // pred_region
    _
  $region5: #{forward.1} parent=0 // pred_fallthru
    _
  // Predicated region
  $region6: #{forward.1} parent=0 // pred_check
    _
  $region7: #{forward.1} parent=0 // pred_check_branch
    %18 = sbr.rel (0) target = $region9
  $region8: #{forward.1} parent=0 // pred_region
    _
  $region9: #{forward.1} parent=0 // pred_fallthru
    _
  // Predicated region
  $region10: #{forward.1} parent=0 // pred_check
    _
  $region11: #{forward.1} parent=0 // pred_check_branch
    %20 = sbr.rel (0) target = $region13
  $region12: #{forward.1} parent=0 // pred_region
    _
  $region13: #{forward.1} parent=0 // pred_fallthru
    _
  // Predicated region
  $region14: #{forward.1} parent=0 // pred_check
    _
  $region15: #{forward.1} parent=0 // pred_check_branch
    %22 = sbr.rel (0) target = $region17
  $region16: #{forward.1} parent=0 // pred_region
    _
  $region17: #{forward.1} parent=0 // pred_fallthru
    _
  // Predicated region
  $region18: #{forward.1} parent=0 // pred_check
    _
  $region19: #{forward.1} parent=0 // pred_check_branch
    %24 = sbr.rel (0) target = $region21
  $region20: #{forward.1} parent=0 // pred_region
    _
  $region21: #{forward.1} parent=0 // pred_fallthru
    _
  // Predicated region
  $region22: #{forward.1} parent=0 // pred_check
    _
  $region23: #{forward.1} parent=0 // pred_check_branch
    %26 = sbr.rel (0) target = $region25
  $region24: #{forward.1} parent=0 // pred_region
    _
  $region25: #{forward.1} parent=0 // pred_fallthru
    _
  // Predicated region
  $region26: #{forward.1} parent=0 // pred_check
    _
  $region27: #{forward.1} parent=0 // pred_check_branch
    %28 = sbr.rel (0) target = $region29
  $region28: #{forward.1} parent=0 // pred_region
    _
  $region29: #{forward.1} parent=0 // pred_fallthru
    _
  // Predicated region
  $region30: #{forward.1} parent=0 // pred_check
    _
  $region31: #{forward.1} parent=0 // pred_check_branch
    %30 = sbr.rel (0) target = $region33
  $region32: #{forward.1} parent=0 // pred_region
    _
  $region33: #{forward.1} parent=0 // pred_fallthru
    _
  %p33 = scmp.lt.u32.totalorder 32, 8
  %p34 = pneg %p33
  // Predicated region
  $region34: #{forward.1} parent=0 // pred_check
    _
  $region35: #{forward.1} parent=0 // pred_check_branch
    %36 = sbr.rel (%p33) target = $region37
  $region36: #{forward.1} parent=0 // pred_region
    %s52 = sand.u32 32, 7
    %p53 = scmp.eq.s32.totalorder %s52, 0
    // Predicated region
    $region49: #{forward.1} parent=36 // pred_check
      %p54 = pneg %p53
    $region50: #{forward.1} parent=36 // pred_check_branch
      %56 = sbr.rel (%p54) target = $region52
    $region51: #{forward.1} parent=36 // pred_region
      loop: start=0, step=1, limit=1
      $region53: #{forward.1} parent=51 // loop_pre_header
        _
      $region54: #{forward.1} parent=51 // loop_header
        %s58 = sphi 0, %s62
        %p59 = scmp.ge.s32.totalorder %s58, 1
        %s63 = sphi %s7, %s7
        %s64 = sphi [#allocation2], [#allocation2]
      $region55: #{forward.1} parent=51 // loop_header_branch
        %61 = sbr.rel (%p59) target = $region59
      $region56: #{forward.1} parent=51 // loop_body
        %v65 = vld [vmem:[%s63] sm:$0xff]
        %66 = vst [vmem:[%s64] sm:$0xff] %v65
        %v67 = vld [vmem:[%s63 + $0x8] sm:$0xff]
        %68 = vst [vmem:[%s64 + $0x8] sm:$0xff] %v67
        %v69 = vld [vmem:[%s63 + $0x10] sm:$0xff]
        %70 = vst [vmem:[%s64 + $0x10] sm:$0xff] %v69
        %v71 = vld [vmem:[%s63 + $0x18] sm:$0xff]
        %72 = vst [vmem:[%s64 + $0x18] sm:$0xff] %v71
      $region57: #{forward.1} parent=51 // loop_footer
        %s62 = sadd.s32 1, %s58
      $region58: #{forward.1} parent=51 // loop_footer_branch
        %57 = sbr.rel target = $region54
      $region59: #{forward.1} parent=51 // loop_exit
        _
    $region52: #{forward.1} parent=36 // pred_fallthru
      _
    %p73 = pneg %p53
    // Predicated region
    $region60: #{forward.1} parent=36 // pred_check
      _
    $region61: #{forward.1} parent=36 // pred_check_branch
      %75 = sbr.rel (%p53) target = $region63
    $region62: #{forward.1} parent=36 // pred_region
      %s76 = sand.u32 32, 7
    $region63: #{forward.1} parent=36 // pred_fallthru
      _
  $region37: #{forward.1} parent=0 // pred_fallthru
    _
  // Predicated region
  $region38: #{forward.1} parent=0 // pred_check
    %p37 = pneg %p33
  $region39: #{forward.1} parent=0 // pred_check_branch
    %39 = sbr.rel (%p37) target = $region41
  $region40: #{forward.1} parent=0 // pred_region
    %s40 = sshll.u32 1, 32
    %s41 = ssub.s32 %s40, 1
    loop: start=0, step=1, limit=1
    $region42: #{forward.1} parent=40 // loop_pre_header
      _
    $region43: #{forward.1} parent=40 // loop_header
      %s43 = sphi 0, %s47
      %p44 = scmp.ge.s32.totalorder %s43, 1
      %s48 = sphi %s7, %s7
      %s49 = sphi [#allocation2], [#allocation2]
    $region44: #{forward.1} parent=40 // loop_header_branch
      %46 = sbr.rel (%p44) target = $region48
    $region45: #{forward.1} parent=40 // loop_body
      %v50 = vld [vmem:[%s48] sm:%s41]
      %51 = vst [vmem:[%s49] sm:%s41] %v50
    $region46: #{forward.1} parent=40 // loop_footer
      %s47 = sadd.s32 1, %s43
    $region47: #{forward.1} parent=40 // loop_footer_branch
      %42 = sbr.rel target = $region43
    $region48: #{forward.1} parent=40 // loop_exit
      _
  $region41: #{forward.1} parent=0 // pred_fallthru
    _
  // Predicated region
  $region64: #{forward.1} parent=0 // pred_check
    _
  $region65: #{forward.1} parent=0 // pred_check_branch
    %79 = sbr.rel (0) target = $region67
  $region66: #{forward.1} parent=0 // pred_region
    %80 = vsyncadd [#allocation4], 512
  $region67: #{forward.1} parent=0 // pred_fallthru
    _
  %s81 = scalar_lea.sflag [#allocation4], 1
  %p83 = scmp.lt.u32.totalorder 128, 8
  %p84 = pneg %p83
  // Predicated region
  $region68: #{forward.1} parent=0 // pred_check
    _
  $region69: #{forward.1} parent=0 // pred_check_branch
    %86 = sbr.rel (%p83) target = $region71
  $region70: #{forward.1} parent=0 // pred_region
    %s102 = sand.u32 128, 7
    %p103 = scmp.eq.s32.totalorder %s102, 0
    // Predicated region
    $region83: #{forward.1} parent=70 // pred_check
      %p104 = pneg %p103
    $region84: #{forward.1} parent=70 // pred_check_branch
      %106 = sbr.rel (%p104) target = $region86
    $region85: #{forward.1} parent=70 // pred_region
      loop: start=0, step=1, limit=1
      $region87: #{forward.1} parent=85 // loop_pre_header
        _
      $region88: #{forward.1} parent=85 // loop_header
        %s108 = sphi 0, %s112
        %p109 = scmp.ge.s32.totalorder %s108, 1
        %s113 = sphi %s8, %s8
        %s114 = sphi [#allocation3], [#allocation3]
      $region89: #{forward.1} parent=85 // loop_header_branch
        %111 = sbr.rel (%p109) target = $region93
      $region90: #{forward.1} parent=85 // loop_body
        %v115 = vld [vmem:[%s113] sm:$0xff]
        %116 = vst [vmem:[%s114] sm:$0xff] %v115
        %v117 = vld [vmem:[%s113 + $0x8] sm:$0xff]
        %118 = vst [vmem:[%s114 + $0x8] sm:$0xff] %v117
        %v119 = vld [vmem:[%s113 + $0x10] sm:$0xff]
        %120 = vst [vmem:[%s114 + $0x10] sm:$0xff] %v119
        %v121 = vld [vmem:[%s113 + $0x18] sm:$0xff]
        %122 = vst [vmem:[%s114 + $0x18] sm:$0xff] %v121
        %v123 = vld [vmem:[%s113 + $0x20] sm:$0xff]
        %124 = vst [vmem:[%s114 + $0x20] sm:$0xff] %v123
        %v125 = vld [vmem:[%s113 + $0x28] sm:$0xff]
        %126 = vst [vmem:[%s114 + $0x28] sm:$0xff] %v125
        %v127 = vld [vmem:[%s113 + $0x30] sm:$0xff]
        %128 = vst [vmem:[%s114 + $0x30] sm:$0xff] %v127
        %v129 = vld [vmem:[%s113 + $0x38] sm:$0xff]
        %130 = vst [vmem:[%s114 + $0x38] sm:$0xff] %v129
        %v131 = vld [vmem:[%s113 + $0x40] sm:$0xff]
        %132 = vst [vmem:[%s114 + $0x40] sm:$0xff] %v131
        %v133 = vld [vmem:[%s113 + $0x48] sm:$0xff]
        %134 = vst [vmem:[%s114 + $0x48] sm:$0xff] %v133
        %v135 = vld [vmem:[%s113 + $0x50] sm:$0xff]
        %136 = vst [vmem:[%s114 + $0x50] sm:$0xff] %v135
        %v137 = vld [vmem:[%s113 + $0x58] sm:$0xff]
        %138 = vst [vmem:[%s114 + $0x58] sm:$0xff] %v137
        %v139 = vld [vmem:[%s113 + $0x60] sm:$0xff]
        %140 = vst [vmem:[%s114 + $0x60] sm:$0xff] %v139
        %v141 = vld [vmem:[%s113 + $0x68] sm:$0xff]
        %142 = vst [vmem:[%s114 + $0x68] sm:$0xff] %v141
        %v143 = vld [vmem:[%s113 + $0x70] sm:$0xff]
        %144 = vst [vmem:[%s114 + $0x70] sm:$0xff] %v143
        %v145 = vld [vmem:[%s113 + $0x78] sm:$0xff]
        %146 = vst [vmem:[%s114 + $0x78] sm:$0xff] %v145
      $region91: #{forward.1} parent=85 // loop_footer
        %s112 = sadd.s32 1, %s108
      $region92: #{forward.1} parent=85 // loop_footer_branch
        %107 = sbr.rel target = $region88
      $region93: #{forward.1} parent=85 // loop_exit
        _
    $region86: #{forward.1} parent=70 // pred_fallthru
      _
    %p147 = pneg %p103
    // Predicated region
    $region94: #{forward.1} parent=70 // pred_check
      _
    $region95: #{forward.1} parent=70 // pred_check_branch
      %149 = sbr.rel (%p103) target = $region97
    $region96: #{forward.1} parent=70 // pred_region
      %s150 = sand.u32 128, 7
    $region97: #{forward.1} parent=70 // pred_fallthru
      _
  $region71: #{forward.1} parent=0 // pred_fallthru
    _
  // Predicated region
  $region72: #{forward.1} parent=0 // pred_check
    %p87 = pneg %p83
  $region73: #{forward.1} parent=0 // pred_check_branch
    %89 = sbr.rel (%p87) target = $region75
  $region74: #{forward.1} parent=0 // pred_region
    %s90 = sshll.u32 1, 128
    %s91 = ssub.s32 %s90, 1
    loop: start=0, step=1, limit=1
    $region76: #{forward.1} parent=74 // loop_pre_header
      _
    $region77: #{forward.1} parent=74 // loop_header
      %s93 = sphi 0, %s97
      %p94 = scmp.ge.s32.totalorder %s93, 1
      %s98 = sphi %s8, %s8
      %s99 = sphi [#allocation3], [#allocation3]
    $region78: #{forward.1} parent=74 // loop_header_branch
      %96 = sbr.rel (%p94) target = $region82
    $region79: #{forward.1} parent=74 // loop_body
      %v100 = vld [vmem:[%s98] sm:%s91]
      %101 = vst [vmem:[%s99] sm:%s91] %v100
    $region80: #{forward.1} parent=74 // loop_footer
      %s97 = sadd.s32 1, %s93
    $region81: #{forward.1} parent=74 // loop_footer_branch
      %92 = sbr.rel target = $region77
    $region82: #{forward.1} parent=74 // loop_exit
      _
  $region75: #{forward.1} parent=0 // pred_fallthru
    _
  // Predicated region
  $region98: #{forward.1} parent=0 // pred_check
    _
  $region99: #{forward.1} parent=0 // pred_check_branch
    %153 = sbr.rel (0) target = $region101
  $region100: #{forward.1} parent=0 // pred_region
    %154 = vsyncadd %s81, 2048
  $region101: #{forward.1} parent=0 // pred_fallthru
    _
  %v155 = vld [vmem:[%s6] sm:$0xff]
  %v156 = vld [vmem:[%s0] sm:$0xff]
  %v157 = vld [vmem:[%s0 + $0x8] sm:$0xff]
  %v158 = vld [vmem:[%s0 + $0x10] sm:$0xff]
  %v159 = vld [vmem:[%s0 + $0x18] sm:$0xff]
  %v160 = vld [vmem:[%s0 + $0x20] sm:$0xff]
  %v161 = vld [vmem:[%s0 + $0x28] sm:$0xff]
  %v162 = vld [vmem:[%s0 + $0x30] sm:$0xff]
  %v163 = vld [vmem:[%s0 + $0x38] sm:$0xff]
  %v164 = vld [vmem:[%s1] sm:$0xff]
  %v165 = vld [vmem:[%s1 + $0x8] sm:$0xff]
  %v166 = vld [vmem:[%s1 + $0x10] sm:$0xff]
  %v167 = vld [vmem:[%s1 + $0x18] sm:$0xff]
  %v168 = vld [vmem:[%s1 + $0x20] sm:$0xff]
  %v169 = vld [vmem:[%s1 + $0x28] sm:$0xff]
  %v170 = vld [vmem:[%s1 + $0x30] sm:$0xff]
  %v171 = vld [vmem:[%s1 + $0x38] sm:$0xff]
  %173 = vset.pattern.permute.xlu0 0
  %174 = vperm.xlu0 %173, %v164
  %v175 = vpop.permute.xlu0 %174
  %178 = vset.pattern.permute.xlu0 0
  %179 = vperm.xlu0 %178, %v165
  %v180 = vpop.permute.xlu0 %179
  %183 = vset.pattern.permute.xlu0 0
  %184 = vperm.xlu0 %183, %v166
  %v185 = vpop.permute.xlu0 %184
  %188 = vset.pattern.permute.xlu0 0
  %189 = vperm.xlu0 %188, %v167
  %v190 = vpop.permute.xlu0 %189
  %193 = vset.pattern.permute.xlu0 0
  %194 = vperm.xlu0 %193, %v168
  %v195 = vpop.permute.xlu0 %194
  %198 = vset.pattern.permute.xlu0 0
  %199 = vperm.xlu0 %198, %v169
  %v200 = vpop.permute.xlu0 %199
  %203 = vset.pattern.permute.xlu0 0
  %204 = vperm.xlu0 %203, %v170
  %v205 = vpop.permute.xlu0 %204
  %208 = vset.pattern.permute.xlu0 0
  %209 = vperm.xlu0 %208, %v171
  %v210 = vpop.permute.xlu0 %209
  %v212 = vmul.f32 %v156, %v175
  %v213 = vmul.f32 %v157, %v180
  %v214 = vmul.f32 %v158, %v185
  %v215 = vmul.f32 %v159, %v190
  %v216 = vmul.f32 %v160, %v195
  %v217 = vmul.f32 %v161, %v200
  %v218 = vmul.f32 %v162, %v205
  %v219 = vmul.f32 %v163, %v210
  %v220 = vpack.c.bf16 %v213, %v212
  %v221 = vpack.c.bf16 %v215, %v214
  %v222 = vpack.c.bf16 %v217, %v216
  %v223 = vpack.c.bf16 %v219, %v218
  %v224 = vld [vmem:[%s3] sm:$0xf]
  %v225 = vld [vmem:[%s3 + $0x4] sm:$0xf]
  %v226 = vld [vmem:[%s2] sm:$0xff]
  %v227 = vld [vmem:[%s2 + $0x8] sm:$0xff]
  %v228 = vld [vmem:[%s2 + $0x10] sm:$0xff]
  %v229 = vld [vmem:[%s2 + $0x18] sm:$0xff]
  %v230 = vld [vmem:[%s2 + $0x20] sm:$0xff]
  %v231 = vld [vmem:[%s2 + $0x28] sm:$0xff]
  %v232 = vld [vmem:[%s2 + $0x30] sm:$0xff]
  %v233 = vld [vmem:[%s2 + $0x38] sm:$0xff]
  %v236 = vunpack.c.l.b16 %v224
  %v237 = vunpack.c.l.b16 %v225
  %v238 = vpack.c.b16 %v237, %v236
  %vm240 = vcmask 130048
  %v242 = vsel %vm240, %v220, 0
  %v245 = vsel %vm240, %v221, 0
  %v248 = vsel %vm240, %v222, 0
  %v251 = vsel %vm240, %v223, 0
  %253 = vmatprep.subr.bf16.mxu0 0
  %254 = vmatpush1.bf16.msra.mxu0 0
  %255 = vmatprep.subr.bf16.mxu0 0
  %256 = vmatpush1.bf16.msra.mxu0 0
  %257 = vmatprep.subr.bf16.mxu0 0
  %258 = vmatpush1.bf16.msra.mxu0 0
  %259 = vmatprep.subr.bf16.mxu0 0
  %260 = vmatpush1.bf16.msra.mxu0 0
  %261 = vmatprep.subr.bf16.mxu0 0
  %262 = vmatpush1.bf16.msra.mxu0 0
  %263 = vmatprep.subr.bf16.mxu0 0
  %264 = vmatpush1.bf16.msra.mxu0 0
  %265 = vmatprep.subr.bf16.mxu0 0
  %266 = vmatpush1.bf16.msra.mxu0 0
  %267 = vmatprep.subr.bf16.mxu0 0
  %268 = vmatpush1.bf16.msra.mxu0 %v238
  %269 = vmatprep.subr.bf16.mxu0 0
  %270 = vmatpush2.bf16.msra.mxu0 0
  %271 = vmatprep.subr.bf16.mxu0 0
  %272 = vmatpush2.bf16.msra.mxu0 0
  %273 = vmatprep.subr.bf16.mxu0 0
  %274 = vmatpush2.bf16.msra.mxu0 0
  %275 = vmatprep.subr.bf16.mxu0 0
  %276 = vmatpush2.bf16.msra.mxu0 0
  %277 = vmatprep.subr.bf16.mxu0 0
  %278 = vmatpush2.bf16.msra.mxu0 0
  %279 = vmatprep.subr.bf16.mxu0 0
  %280 = vmatpush2.bf16.msra.mxu0 0
  %281 = vmatprep.subr.bf16.mxu0 0
  %282 = vmatpush2.bf16.msra.mxu0 0
  %283 = vmatprep.subr.bf16.mxu0 0
  %284 = vmatpush2.bf16.msra.mxu0 0
  %285 = vmatprep.mubr.bf16.mxu0 0
  %286 = vmatmul.mubr.bf16.gmra.mxu0 %v242
  %v287 = vpop.f32.mrf.mxu0
  %v288 = vadd.f32 %v226, %v287
  %v289 = vpop.f32.mrf.mxu0
  %v290 = vpop.f32.mrf.mxu0
  %v291 = vadd.f32 %v227, %v290
  %v292 = vpop.f32.mrf.mxu0
  %293 = vmatprep.mubr.bf16.mxu0 0
  %294 = vmatmul.mubr.bf16.gmra.mxu0 %v245
  %v295 = vpop.f32.mrf.mxu0
  %v296 = vadd.f32 %v228, %v295
  %v297 = vpop.f32.mrf.mxu0
  %v298 = vpop.f32.mrf.mxu0
  %v299 = vadd.f32 %v229, %v298
  %v300 = vpop.f32.mrf.mxu0
  %301 = vmatprep.mubr.bf16.mxu0 0
  %302 = vmatmul.mubr.bf16.gmra.mxu0 %v248
  %v303 = vpop.f32.mrf.mxu0
  %v304 = vadd.f32 %v230, %v303
  %v305 = vpop.f32.mrf.mxu0
  %v306 = vpop.f32.mrf.mxu0
  %v307 = vadd.f32 %v231, %v306
  %v308 = vpop.f32.mrf.mxu0
  %309 = vmatprep.mubr.bf16.mxu0 0
  %310 = vmatmul.mubr.bf16.gmra.mxu0 %v251
  %v311 = vpop.f32.mrf.mxu0
  %v312 = vadd.f32 %v232, %v311
  %v313 = vpop.f32.mrf.mxu0
  %v314 = vpop.f32.mrf.mxu0
  %v315 = vadd.f32 %v233, %v314
  %v316 = vpop.f32.mrf.mxu0
  %317 = vdwg.mxu0
  %v318 = vmax.f32 %v288, 0.0
  %v319 = vmax.f32 %v291, 0.0
  %v320 = vmax.f32 %v296, 0.0
  %v321 = vmax.f32 %v299, 0.0
  %v322 = vmax.f32 %v304, 0.0
  %v323 = vmax.f32 %v307, 0.0
  %v324 = vmax.f32 %v312, 0.0
  %v325 = vmax.f32 %v315, 0.0
  %v326 = vpack.c.bf16 %v319, %v318
  %v327 = vpack.c.bf16 %v321, %v320
  %v328 = vpack.c.bf16 %v323, %v322
  %v329 = vpack.c.bf16 %v325, %v324
  %v330 = vld [vmem:[%s4] sm:$0xf]
  %v331 = vld [vmem:[%s4 + $0x4] sm:$0xf]
  %v332 = vld [vmem:[%s4 + $0x8] sm:$0xf]
  %v333 = vld [vmem:[%s4 + $0xc] sm:$0xf]
  %v334 = vld [vmem:[%s4 + $0x10] sm:$0xf]
  %v335 = vld [vmem:[%s4 + $0x14] sm:$0xf]
  %v336 = vld [vmem:[%s4 + $0x18] sm:$0xf]
  %v337 = vld [vmem:[%s4 + $0x1c] sm:$0xf]
  %v338 = vlaneseq
  %v339 = vshrl.u32 %v338, 7
  %v340 = vsub.s32 0, %v339
  %v341 = vrot.slane %v155, %v340
  %v350 = vunpack.c.l.b16 %v330
  %v351 = vunpack.c.l.b16 %v331
  %v352 = vunpack.c.l.b16 %v332
  %v353 = vunpack.c.l.b16 %v333
  %v354 = vunpack.c.l.b16 %v334
  %v355 = vunpack.c.l.b16 %v335
  %v356 = vunpack.c.l.b16 %v336
  %v357 = vunpack.c.l.b16 %v337
  %v358 = vpack.c.b16 %v351, %v350
  %v359 = vpack.c.b16 %v353, %v352
  %v360 = vpack.c.b16 %v355, %v354
  %v361 = vpack.c.b16 %v357, %v356
  %vm366 = vcmask 523264
  %v368 = vsel %vm366, %v326, 0
  %v371 = vsel %vm366, %v327, 0
  %v374 = vsel %vm366, %v328, 0
  %v377 = vsel %vm366, %v329, 0
  %379 = vmatprep.subr.bf16.mxu0 0
  %380 = vmatpush1.bf16.msra.mxu0 0
  %381 = vmatprep.subr.bf16.mxu0 0
  %382 = vmatpush1.bf16.msra.mxu0 0
  %383 = vmatprep.subr.bf16.mxu0 0
  %384 = vmatpush1.bf16.msra.mxu0 0
  %385 = vmatprep.subr.bf16.mxu0 0
  %386 = vmatpush1.bf16.msra.mxu0 0
  %387 = vmatprep.subr.bf16.mxu0 0
  %388 = vmatpush1.bf16.msra.mxu0 %v361
  %389 = vmatprep.subr.bf16.mxu0 0
  %390 = vmatpush1.bf16.msra.mxu0 %v360
  %391 = vmatprep.subr.bf16.mxu0 0
  %392 = vmatpush1.bf16.msra.mxu0 %v359
  %393 = vmatprep.subr.bf16.mxu0 0
  %394 = vmatpush1.bf16.msra.mxu0 %v358
  %395 = vmatprep.subr.bf16.mxu0 0
  %396 = vmatpush2.bf16.msra.mxu0 0
  %397 = vmatprep.subr.bf16.mxu0 0
  %398 = vmatpush2.bf16.msra.mxu0 0
  %399 = vmatprep.subr.bf16.mxu0 0
  %400 = vmatpush2.bf16.msra.mxu0 0
  %401 = vmatprep.subr.bf16.mxu0 0
  %402 = vmatpush2.bf16.msra.mxu0 0
  %403 = vmatprep.subr.bf16.mxu0 0
  %404 = vmatpush2.bf16.msra.mxu0 0
  %405 = vmatprep.subr.bf16.mxu0 0
  %406 = vmatpush2.bf16.msra.mxu0 0
  %407 = vmatprep.subr.bf16.mxu0 0
  %408 = vmatpush2.bf16.msra.mxu0 0
  %409 = vmatprep.subr.bf16.mxu0 0
  %410 = vmatpush2.bf16.msra.mxu0 0
  %411 = vmatprep.mubr.bf16.mxu0 0
  %412 = vmatmul.mubr.bf16.gmra.mxu0 %v368
  %v413 = vpop.f32.mrf.mxu0
  %v414 = vadd.f32 %v341, %v413
  %v415 = vpop.f32.mrf.mxu0
  %v416 = vpop.f32.mrf.mxu0
  %v417 = vadd.f32 %v341, %v416
  %v418 = vpop.f32.mrf.mxu0
  %419 = vmatprep.mubr.bf16.mxu0 0
  %420 = vmatmul.mubr.bf16.gmra.mxu0 %v371
  %v421 = vpop.f32.mrf.mxu0
  %v422 = vadd.f32 %v341, %v421
  %v423 = vpop.f32.mrf.mxu0
  %v424 = vpop.f32.mrf.mxu0
  %v425 = vadd.f32 %v341, %v424
  %v426 = vpop.f32.mrf.mxu0
  %427 = vmatprep.mubr.bf16.mxu0 0
  %428 = vmatmul.mubr.bf16.gmra.mxu0 %v374
  %v429 = vpop.f32.mrf.mxu0
  %v430 = vadd.f32 %v341, %v429
  %v431 = vpop.f32.mrf.mxu0
  %v432 = vpop.f32.mrf.mxu0
  %v433 = vadd.f32 %v341, %v432
  %v434 = vpop.f32.mrf.mxu0
  %435 = vmatprep.mubr.bf16.mxu0 0
  %436 = vmatmul.mubr.bf16.gmra.mxu0 %v377
  %v437 = vpop.f32.mrf.mxu0
  %v438 = vadd.f32 %v341, %v437
  %v439 = vpop.f32.mrf.mxu0
  %v440 = vpop.f32.mrf.mxu0
  %v441 = vadd.f32 %v341, %v440
  %v442 = vpop.f32.mrf.mxu0
  %443 = vdwg.mxu0
  %v444 = vld [vmem:[%s5] sm:$0xf]
  %v445 = vld [vmem:[%s5 + $0x4] sm:$0xf]
  %v446 = vld [vmem:[%s5 + $0x8] sm:$0xf]
  %v447 = vld [vmem:[%s5 + $0xc] sm:$0xf]
  %v448 = vlaneseq
  %v449 = vand.u32 %v448, 127
  %vm450 = vcmp.ge.s32.totalorder %v449, 64
  %vm451 = vcmp.lt.s32.totalorder %v449, 96
  %vm452 = vmand %vm450, %vm451
  %v453 = vmul.f32 %v414, 0.5
  %v454 = vsel %vm452, %v414, %v453
  %v455 = vtanh.pop %v454
  %v456 = vmul.f32 %v455, 0.5
  %v457 = vadd.f32 %v456, 0.5
  %v458 = vsel %vm452, %v455, %v457
  %v459 = vmul.f32 %v458, 0.0
  %461 = vrot.lane.b32.xlu0 %v458, 64
  %v462 = vpop.permute.xlu0 %461
  %v464 = vmul.f32 %v458, %v462
  %466 = vrot.lane.b32.xlu0 %v464, 32
  %v467 = vpop.permute.xlu0 %466
  %v469 = vadd.f32 %v459, %v467
  %v470 = vtanh.pop %v469
  %472 = vrot.lane.b32.xlu0 %v470, 64
  %v473 = vpop.permute.xlu0 %472
  %v475 = vmul.f32 %v458, %v473
  %v476 = vpack.c.bf16 %v475, %v475
  %478 = vrot.lane.b32.xlu0 %v476, 32
  %v479 = vpop.permute.xlu0 %478
  %v484 = vunpack.c.l.b16 %v444
  %v485 = vunpack.c.l.b16 %v445
  %v486 = vunpack.c.l.b16 %v446
  %v487 = vunpack.c.l.b16 %v447
  %v488 = vpack.c.b16 %v485, %v484
  %v489 = vpack.c.b16 %v487, %v486
  %vm492 = vcmask 261120
  %v494 = vsel %vm492, %v479, 0
  %496 = vmatprep.subr.bf16.mxu0 0
  %497 = vmatpush1.bf16.msra.mxu0 0
  %498 = vmatprep.subr.bf16.mxu0 0
  %499 = vmatpush1.bf16.msra.mxu0 0
  %500 = vmatprep.subr.bf16.mxu0 0
  %501 = vmatpush1.bf16.msra.mxu0 0
  %502 = vmatprep.subr.bf16.mxu0 0
  %503 = vmatpush1.bf16.msra.mxu0 0
  %504 = vmatprep.subr.bf16.mxu0 0
  %505 = vmatpush1.bf16.msra.mxu0 0
  %506 = vmatprep.subr.bf16.mxu0 0
  %507 = vmatpush1.bf16.msra.mxu0 0
  %508 = vmatprep.subr.bf16.mxu0 0
  %509 = vmatpush1.bf16.msra.mxu0 %v489
  %510 = vmatprep.subr.bf16.mxu0 0
  %511 = vmatpush1.bf16.msra.mxu0 %v488
  %512 = vmatprep.subr.bf16.mxu0 0
  %513 = vmatpush2.bf16.msra.mxu0 0
  %514 = vmatprep.subr.bf16.mxu0 0
  %515 = vmatpush2.bf16.msra.mxu0 0
  %516 = vmatprep.subr.bf16.mxu0 0
  %517 = vmatpush2.bf16.msra.mxu0 0
  %518 = vmatprep.subr.bf16.mxu0 0
  %519 = vmatpush2.bf16.msra.mxu0 0
  %520 = vmatprep.subr.bf16.mxu0 0
  %521 = vmatpush2.bf16.msra.mxu0 0
  %522 = vmatprep.subr.bf16.mxu0 0
  %523 = vmatpush2.bf16.msra.mxu0 0
  %524 = vmatprep.subr.bf16.mxu0 0
  %525 = vmatpush2.bf16.msra.mxu0 0
  %526 = vmatprep.subr.bf16.mxu0 0
  %527 = vmatpush2.bf16.msra.mxu0 0
  %528 = vmatprep.mubr.bf16.mxu0 0
  %529 = vmatmul.mubr.bf16.gmra.mxu0 %v494
  %v530 = vpop.f32.mrf.mxu0
  %v531 = vadd.f32 0.0, %v530
  %v532 = vpop.f32.mrf.mxu0
  %v533 = vpop.f32.mrf.mxu0
  %v534 = vpop.f32.mrf.mxu0
  %535 = vdwg.mxu0
  %v536 = vadd.f32 %v417, %v531
  %v537 = vmul.f32 %v536, 0.5
  %v538 = vsel %vm452, %v536, %v537
  %v539 = vtanh.pop %v538
  %v540 = vmul.f32 %v539, 0.5
  %v541 = vadd.f32 %v540, 0.5
  %v542 = vsel %vm452, %v539, %v541
  %v543 = vmul.f32 %v542, %v469
  %545 = vrot.lane.b32.xlu0 %v542, 64
  %v546 = vpop.permute.xlu0 %545
  %v548 = vmul.f32 %v542, %v546
  %550 = vrot.lane.b32.xlu0 %v548, 32
  %v551 = vpop.permute.xlu0 %550
  %v553 = vadd.f32 %v543, %v551
  %v554 = vtanh.pop %v553
  %556 = vrot.lane.b32.xlu0 %v554, 64
  %v557 = vpop.permute.xlu0 %556
  %v559 = vmul.f32 %v542, %v557
  %v560 = vpack.c.bf16 %v559, %v559
  %562 = vrot.lane.b32.xlu0 %v560, 32
  %v563 = vpop.permute.xlu0 %562
  %v565 = vsel %vm492, %v563, 0
  %567 = vmatprep.subr.bf16.mxu0 0
  %568 = vmatpush1.bf16.msra.mxu0 0
  %569 = vmatprep.subr.bf16.mxu0 0
  %570 = vmatpush1.bf16.msra.mxu0 0
  %571 = vmatprep.subr.bf16.mxu0 0
  %572 = vmatpush1.bf16.msra.mxu0 0
  %573 = vmatprep.subr.bf16.mxu0 0
  %574 = vmatpush1.bf16.msra.mxu0 0
  %575 = vmatprep.subr.bf16.mxu0 0
  %576 = vmatpush1.bf16.msra.mxu0 0
  %577 = vmatprep.subr.bf16.mxu0 0
  %578 = vmatpush1.bf16.msra.mxu0 0
  %579 = vmatprep.subr.bf16.mxu0 0
  %580 = vmatpush1.bf16.msra.mxu0 %v489
  %581 = vmatprep.subr.bf16.mxu0 0
  %582 = vmatpush1.bf16.msra.mxu0 %v488
  %583 = vmatprep.subr.bf16.mxu0 0
  %584 = vmatpush2.bf16.msra.mxu0 0
  %585 = vmatprep.subr.bf16.mxu0 0
  %586 = vmatpush2.bf16.msra.mxu0 0
  %587 = vmatprep.subr.bf16.mxu0 0
  %588 = vmatpush2.bf16.msra.mxu0 0
  %589 = vmatprep.subr.bf16.mxu0 0
  %590 = vmatpush2.bf16.msra.mxu0 0
  %591 = vmatprep.subr.bf16.mxu0 0
  %592 = vmatpush2.bf16.msra.mxu0 0
  %593 = vmatprep.subr.bf16.mxu0 0
  %594 = vmatpush2.bf16.msra.mxu0 0
  %595 = vmatprep.subr.bf16.mxu0 0
  %596 = vmatpush2.bf16.msra.mxu0 0
  %597 = vmatprep.subr.bf16.mxu0 0
  %598 = vmatpush2.bf16.msra.mxu0 0
  %599 = vmatprep.mubr.bf16.mxu0 0
  %600 = vmatmul.mubr.bf16.gmra.mxu0 %v565
  %v601 = vpop.f32.mrf.mxu0
  %v602 = vadd.f32 0.0, %v601
  %v603 = vpop.f32.mrf.mxu0
  %v604 = vpop.f32.mrf.mxu0
  %v605 = vpop.f32.mrf.mxu0
  %606 = vdwg.mxu0
  %v607 = vadd.f32 %v422, %v602
  %v608 = vmul.f32 %v607, 0.5
  %v609 = vsel %vm452, %v607, %v608
  %v610 = vtanh.pop %v609
  %v611 = vmul.f32 %v610, 0.5
  %v612 = vadd.f32 %v611, 0.5
  %v613 = vsel %vm452, %v610, %v612
  %v614 = vmul.f32 %v613, %v553
  %616 = vrot.lane.b32.xlu0 %v613, 64
  %v617 = vpop.permute.xlu0 %616
  %v619 = vmul.f32 %v613, %v617
  %621 = vrot.lane.b32.xlu0 %v619, 32
  %v622 = vpop.permute.xlu0 %621
  %v624 = vadd.f32 %v614, %v622
  %v625 = vtanh.pop %v624
  %627 = vrot.lane.b32.xlu0 %v625, 64
  %v628 = vpop.permute.xlu0 %627
  %v630 = vmul.f32 %v613, %v628
  %v631 = vpack.c.bf16 %v630, %v630
  %633 = vrot.lane.b32.xlu0 %v631, 32
  %v634 = vpop.permute.xlu0 %633
  %v636 = vsel %vm492, %v634, 0
  %638 = vmatprep.subr.bf16.mxu0 0
  %639 = vmatpush1.bf16.msra.mxu0 0
  %640 = vmatprep.subr.bf16.mxu0 0
  %641 = vmatpush1.bf16.msra.mxu0 0
  %642 = vmatprep.subr.bf16.mxu0 0
  %643 = vmatpush1.bf16.msra.mxu0 0
  %644 = vmatprep.subr.bf16.mxu0 0
  %645 = vmatpush1.bf16.msra.mxu0 0
  %646 = vmatprep.subr.bf16.mxu0 0
  %647 = vmatpush1.bf16.msra.mxu0 0
  %648 = vmatprep.subr.bf16.mxu0 0
  %649 = vmatpush1.bf16.msra.mxu0 0
  %650 = vmatprep.subr.bf16.mxu0 0
  %651 = vmatpush1.bf16.msra.mxu0 %v489
  %652 = vmatprep.subr.bf16.mxu0 0
  %653 = vmatpush1.bf16.msra.mxu0 %v488
  %654 = vmatprep.subr.bf16.mxu0 0
  %655 = vmatpush2.bf16.msra.mxu0 0
  %656 = vmatprep.subr.bf16.mxu0 0
  %657 = vmatpush2.bf16.msra.mxu0 0
  %658 = vmatprep.subr.bf16.mxu0 0
  %659 = vmatpush2.bf16.msra.mxu0 0
  %660 = vmatprep.subr.bf16.mxu0 0
  %661 = vmatpush2.bf16.msra.mxu0 0
  %662 = vmatprep.subr.bf16.mxu0 0
  %663 = vmatpush2.bf16.msra.mxu0 0
  %664 = vmatprep.subr.bf16.mxu0 0
  %665 = vmatpush2.bf16.msra.mxu0 0
  %666 = vmatprep.subr.bf16.mxu0 0
  %667 = vmatpush2.bf16.msra.mxu0 0
  %668 = vmatprep.subr.bf16.mxu0 0
  %669 = vmatpush2.bf16.msra.mxu0 0
  %670 = vmatprep.mubr.bf16.mxu0 0
  %671 = vmatmul.mubr.bf16.gmra.mxu0 %v636
  %v672 = vpop.f32.mrf.mxu0
  %v673 = vadd.f32 0.0, %v672
  %v674 = vpop.f32.mrf.mxu0
  %v675 = vpop.f32.mrf.mxu0
  %v676 = vpop.f32.mrf.mxu0
  %677 = vdwg.mxu0
  %v678 = vadd.f32 %v425, %v673
  %v679 = vmul.f32 %v678, 0.5
  %v680 = vsel %vm452, %v678, %v679
  %v681 = vtanh.pop %v680
  %v682 = vmul.f32 %v681, 0.5
  %v683 = vadd.f32 %v682, 0.5
  %v684 = vsel %vm452, %v681, %v683
  %v685 = vmul.f32 %v684, %v624
  %687 = vrot.lane.b32.xlu0 %v684, 64
  %v688 = vpop.permute.xlu0 %687
  %v690 = vmul.f32 %v684, %v688
  %692 = vrot.lane.b32.xlu0 %v690, 32
  %v693 = vpop.permute.xlu0 %692
  %v695 = vadd.f32 %v685, %v693
  %v696 = vtanh.pop %v695
  %698 = vrot.lane.b32.xlu0 %v696, 64
  %v699 = vpop.permute.xlu0 %698
  %v701 = vmul.f32 %v684, %v699
  %v702 = vpack.c.bf16 %v701, %v701
  %704 = vrot.lane.b32.xlu0 %v702, 32
  %v705 = vpop.permute.xlu0 %704
  %v707 = vsel %vm492, %v705, 0
  %709 = vmatprep.subr.bf16.mxu0 0
  %710 = vmatpush1.bf16.msra.mxu0 0
  %711 = vmatprep.subr.bf16.mxu0 0
  %712 = vmatpush1.bf16.msra.mxu0 0
  %713 = vmatprep.subr.bf16.mxu0 0
  %714 = vmatpush1.bf16.msra.mxu0 0
  %715 = vmatprep.subr.bf16.mxu0 0
  %716 = vmatpush1.bf16.msra.mxu0 0
  %717 = vmatprep.subr.bf16.mxu0 0
  %718 = vmatpush1.bf16.msra.mxu0 0
  %719 = vmatprep.subr.bf16.mxu0 0
  %720 = vmatpush1.bf16.msra.mxu0 0
  %721 = vmatprep.subr.bf16.mxu0 0
  %722 = vmatpush1.bf16.msra.mxu0 %v489
  %723 = vmatprep.subr.bf16.mxu0 0
  %724 = vmatpush1.bf16.msra.mxu0 %v488
  %725 = vmatprep.subr.bf16.mxu0 0
  %726 = vmatpush2.bf16.msra.mxu0 0
  %727 = vmatprep.subr.bf16.mxu0 0
  %728 = vmatpush2.bf16.msra.mxu0 0
  %729 = vmatprep.subr.bf16.mxu0 0
  %730 = vmatpush2.bf16.msra.mxu0 0
  %731 = vmatprep.subr.bf16.mxu0 0
  %732 = vmatpush2.bf16.msra.mxu0 0
  %733 = vmatprep.subr.bf16.mxu0 0
  %734 = vmatpush2.bf16.msra.mxu0 0
  %735 = vmatprep.subr.bf16.mxu0 0
  %736 = vmatpush2.bf16.msra.mxu0 0
  %737 = vmatprep.subr.bf16.mxu0 0
  %738 = vmatpush2.bf16.msra.mxu0 0
  %739 = vmatprep.subr.bf16.mxu0 0
  %740 = vmatpush2.bf16.msra.mxu0 0
  %741 = vmatprep.mubr.bf16.mxu0 0
  %742 = vmatmul.mubr.bf16.gmra.mxu0 %v707
  %v743 = vpop.f32.mrf.mxu0
  %v744 = vadd.f32 0.0, %v743
  %v745 = vpop.f32.mrf.mxu0
  %v746 = vpop.f32.mrf.mxu0
  %v747 = vpop.f32.mrf.mxu0
  %748 = vdwg.mxu0
  %v749 = vadd.f32 %v430, %v744
  %v750 = vmul.f32 %v749, 0.5
  %v751 = vsel %vm452, %v749, %v750
  %v752 = vtanh.pop %v751
  %v753 = vmul.f32 %v752, 0.5
  %v754 = vadd.f32 %v753, 0.5
  %v755 = vsel %vm452, %v752, %v754
  %v756 = vmul.f32 %v755, %v695
  %758 = vrot.lane.b32.xlu0 %v755, 64
  %v759 = vpop.permute.xlu0 %758
  %v761 = vmul.f32 %v755, %v759
  %763 = vrot.lane.b32.xlu0 %v761, 32
  %v764 = vpop.permute.xlu0 %763
  %v766 = vadd.f32 %v756, %v764
  %v767 = vtanh.pop %v766
  %769 = vrot.lane.b32.xlu0 %v767, 64
  %v770 = vpop.permute.xlu0 %769
  %v772 = vmul.f32 %v755, %v770
  %v773 = vpack.c.bf16 %v772, %v772
  %775 = vrot.lane.b32.xlu0 %v773, 32
  %v776 = vpop.permute.xlu0 %775
  %v778 = vsel %vm492, %v776, 0
  %780 = vmatprep.subr.bf16.mxu0 0
  %781 = vmatpush1.bf16.msra.mxu0 0
  %782 = vmatprep.subr.bf16.mxu0 0
  %783 = vmatpush1.bf16.msra.mxu0 0
  %784 = vmatprep.subr.bf16.mxu0 0
  %785 = vmatpush1.bf16.msra.mxu0 0
  %786 = vmatprep.subr.bf16.mxu0 0
  %787 = vmatpush1.bf16.msra.mxu0 0
  %788 = vmatprep.subr.bf16.mxu0 0
  %789 = vmatpush1.bf16.msra.mxu0 0
  %790 = vmatprep.subr.bf16.mxu0 0
  %791 = vmatpush1.bf16.msra.mxu0 0
  %792 = vmatprep.subr.bf16.mxu0 0
  %793 = vmatpush1.bf16.msra.mxu0 %v489
  %794 = vmatprep.subr.bf16.mxu0 0
  %795 = vmatpush1.bf16.msra.mxu0 %v488
  %796 = vmatprep.subr.bf16.mxu0 0
  %797 = vmatpush2.bf16.msra.mxu0 0
  %798 = vmatprep.subr.bf16.mxu0 0
  %799 = vmatpush2.bf16.msra.mxu0 0
  %800 = vmatprep.subr.bf16.mxu0 0
  %801 = vmatpush2.bf16.msra.mxu0 0
  %802 = vmatprep.subr.bf16.mxu0 0
  %803 = vmatpush2.bf16.msra.mxu0 0
  %804 = vmatprep.subr.bf16.mxu0 0
  %805 = vmatpush2.bf16.msra.mxu0 0
  %806 = vmatprep.subr.bf16.mxu0 0
  %807 = vmatpush2.bf16.msra.mxu0 0
  %808 = vmatprep.subr.bf16.mxu0 0
  %809 = vmatpush2.bf16.msra.mxu0 0
  %810 = vmatprep.subr.bf16.mxu0 0
  %811 = vmatpush2.bf16.msra.mxu0 0
  %812 = vmatprep.mubr.bf16.mxu0 0
  %813 = vmatmul.mubr.bf16.gmra.mxu0 %v778
  %v814 = vpop.f32.mrf.mxu0
  %v815 = vadd.f32 0.0, %v814
  %v816 = vpop.f32.mrf.mxu0
  %v817 = vpop.f32.mrf.mxu0
  %v818 = vpop.f32.mrf.mxu0
  %819 = vdwg.mxu0
  %v820 = vadd.f32 %v433, %v815
  %v821 = vmul.f32 %v820, 0.5
  %v822 = vsel %vm452, %v820, %v821
  %v823 = vtanh.pop %v822
  %v824 = vmul.f32 %v823, 0.5
  %v825 = vadd.f32 %v824, 0.5
  %v826 = vsel %vm452, %v823, %v825
  %v827 = vmul.f32 %v826, %v766
  %829 = vrot.lane.b32.xlu0 %v826, 64
  %v830 = vpop.permute.xlu0 %829
  %v832 = vmul.f32 %v826, %v830
  %834 = vrot.lane.b32.xlu0 %v832, 32
  %v835 = vpop.permute.xlu0 %834
  %v837 = vadd.f32 %v827, %v835
  %v838 = vtanh.pop %v837
  %840 = vrot.lane.b32.xlu0 %v838, 64
  %v841 = vpop.permute.xlu0 %840
  %v843 = vmul.f32 %v826, %v841
  %v844 = vpack.c.bf16 %v843, %v843
  %846 = vrot.lane.b32.xlu0 %v844, 32
  %v847 = vpop.permute.xlu0 %846
  %v849 = vsel %vm492, %v847, 0
  %851 = vmatprep.subr.bf16.mxu0 0
  %852 = vmatpush1.bf16.msra.mxu0 0
  %853 = vmatprep.subr.bf16.mxu0 0
  %854 = vmatpush1.bf16.msra.mxu0 0
  %855 = vmatprep.subr.bf16.mxu0 0
  %856 = vmatpush1.bf16.msra.mxu0 0
  %857 = vmatprep.subr.bf16.mxu0 0
  %858 = vmatpush1.bf16.msra.mxu0 0
  %859 = vmatprep.subr.bf16.mxu0 0
  %860 = vmatpush1.bf16.msra.mxu0 0
  %861 = vmatprep.subr.bf16.mxu0 0
  %862 = vmatpush1.bf16.msra.mxu0 0
  %863 = vmatprep.subr.bf16.mxu0 0
  %864 = vmatpush1.bf16.msra.mxu0 %v489
  %865 = vmatprep.subr.bf16.mxu0 0
  %866 = vmatpush1.bf16.msra.mxu0 %v488
  %867 = vmatprep.subr.bf16.mxu0 0
  %868 = vmatpush2.bf16.msra.mxu0 0
  %869 = vmatprep.subr.bf16.mxu0 0
  %870 = vmatpush2.bf16.msra.mxu0 0
  %871 = vmatprep.subr.bf16.mxu0 0
  %872 = vmatpush2.bf16.msra.mxu0 0
  %873 = vmatprep.subr.bf16.mxu0 0
  %874 = vmatpush2.bf16.msra.mxu0 0
  %875 = vmatprep.subr.bf16.mxu0 0
  %876 = vmatpush2.bf16.msra.mxu0 0
  %877 = vmatprep.subr.bf16.mxu0 0
  %878 = vmatpush2.bf16.msra.mxu0 0
  %879 = vmatprep.subr.bf16.mxu0 0
  %880 = vmatpush2.bf16.msra.mxu0 0
  %881 = vmatprep.subr.bf16.mxu0 0
  %882 = vmatpush2.bf16.msra.mxu0 0
  %883 = vmatprep.mubr.bf16.mxu0 0
  %884 = vmatmul.mubr.bf16.gmra.mxu0 %v849
  %v885 = vpop.f32.mrf.mxu0
  %v886 = vadd.f32 0.0, %v885
  %v887 = vpop.f32.mrf.mxu0
  %v888 = vpop.f32.mrf.mxu0
  %v889 = vpop.f32.mrf.mxu0
  %890 = vdwg.mxu0
  %v891 = vadd.f32 %v438, %v886
  %v892 = vmul.f32 %v891, 0.5
  %v893 = vsel %vm452, %v891, %v892
  %v894 = vtanh.pop %v893
  %v895 = vmul.f32 %v894, 0.5
  %v896 = vadd.f32 %v895, 0.5
  %v897 = vsel %vm452, %v894, %v896
  %v898 = vmul.f32 %v897, %v837
  %900 = vrot.lane.b32.xlu0 %v897, 64
  %v901 = vpop.permute.xlu0 %900
  %v903 = vmul.f32 %v897, %v901
  %905 = vrot.lane.b32.xlu0 %v903, 32
  %v906 = vpop.permute.xlu0 %905
  %v908 = vadd.f32 %v898, %v906
  %v909 = vtanh.pop %v908
  %911 = vrot.lane.b32.xlu0 %v909, 64
  %v912 = vpop.permute.xlu0 %911
  %v914 = vmul.f32 %v897, %v912
  %v915 = vpack.c.bf16 %v914, %v914
  %917 = vrot.lane.b32.xlu0 %v915, 32
  %v918 = vpop.permute.xlu0 %917
  %v920 = vsel %vm492, %v918, 0
  %922 = vmatprep.subr.bf16.mxu0 0
  %923 = vmatpush1.bf16.msra.mxu0 0
  %924 = vmatprep.subr.bf16.mxu0 0
  %925 = vmatpush1.bf16.msra.mxu0 0
  %926 = vmatprep.subr.bf16.mxu0 0
  %927 = vmatpush1.bf16.msra.mxu0 0
  %928 = vmatprep.subr.bf16.mxu0 0
  %929 = vmatpush1.bf16.msra.mxu0 0
  %930 = vmatprep.subr.bf16.mxu0 0
  %931 = vmatpush1.bf16.msra.mxu0 0
  %932 = vmatprep.subr.bf16.mxu0 0
  %933 = vmatpush1.bf16.msra.mxu0 0
  %934 = vmatprep.subr.bf16.mxu0 0
  %935 = vmatpush1.bf16.msra.mxu0 %v489
  %936 = vmatprep.subr.bf16.mxu0 0
  %937 = vmatpush1.bf16.msra.mxu0 %v488
  %938 = vmatprep.subr.bf16.mxu0 0
  %939 = vmatpush2.bf16.msra.mxu0 0
  %940 = vmatprep.subr.bf16.mxu0 0
  %941 = vmatpush2.bf16.msra.mxu0 0
  %942 = vmatprep.subr.bf16.mxu0 0
  %943 = vmatpush2.bf16.msra.mxu0 0
  %944 = vmatprep.subr.bf16.mxu0 0
  %945 = vmatpush2.bf16.msra.mxu0 0
  %946 = vmatprep.subr.bf16.mxu0 0
  %947 = vmatpush2.bf16.msra.mxu0 0
  %948 = vmatprep.subr.bf16.mxu0 0
  %949 = vmatpush2.bf16.msra.mxu0 0
  %950 = vmatprep.subr.bf16.mxu0 0
  %951 = vmatpush2.bf16.msra.mxu0 0
  %952 = vmatprep.subr.bf16.mxu0 0
  %953 = vmatpush2.bf16.msra.mxu0 0
  %954 = vmatprep.mubr.bf16.mxu0 0
  %955 = vmatmul.mubr.bf16.gmra.mxu0 %v920
  %v956 = vpop.f32.mrf.mxu0
  %v957 = vadd.f32 0.0, %v956
  %v958 = vpop.f32.mrf.mxu0
  %v959 = vpop.f32.mrf.mxu0
  %v960 = vpop.f32.mrf.mxu0
  %961 = vdwg.mxu0
  %v962 = vadd.f32 %v441, %v957
  %v963 = vmul.f32 %v962, 0.5
  %v964 = vsel %vm452, %v962, %v963
  %v965 = vtanh.pop %v964
  %v966 = vmul.f32 %v965, 0.5
  %v967 = vadd.f32 %v966, 0.5
  %v968 = vsel %vm452, %v965, %v967
  %v969 = vmul.f32 %v968, %v908
  %971 = vrot.lane.b32.xlu0 %v968, 64
  %v972 = vpop.permute.xlu0 %971
  %v974 = vmul.f32 %v968, %v972
  %976 = vrot.lane.b32.xlu0 %v974, 32
  %v977 = vpop.permute.xlu0 %976
  %v979 = vadd.f32 %v969, %v977
  %v980 = vtanh.pop %v979
  %982 = vrot.lane.b32.xlu0 %v980, 64
  %v983 = vpop.permute.xlu0 %982
  %v985 = vmul.f32 %v968, %v983
  %s986 = smul.u32 4, 4
  %s987 = smul.u32 %s986, 2
  %s988 = sshll.u32 %s987, 4
  %989 = dma.done [#allocation4], %s988
  %s990 = smul.u32 4, 32
  %s991 = smul.u32 %s990, 1
  %s992 = sshll.u32 %s991, 4
  %993 = dma.done %s81, %s992
  %v994 = vpack.c.bf16 %v985, %v985
  %v995 = vld [vmem:[#allocation2] sm:$0xff]
  %v996 = vld [vmem:[#allocation2 + $0x8] sm:$0xff]
  %v997 = vld [vmem:[#allocation2 + $0x10] sm:$0xff]
  %v998 = vld [vmem:[#allocation2 + $0x18] sm:$0xff]
  %v1000 = vlaneseq
  %v1001 = vshrl.u32 %v1000, 7
  %v1002 = vsub.s32 1, %v1001
  %v1003 = vrot.slane %v155, %v1002
  %v1004 = vlaneseq
  %v1005 = vshrl.u32 %v1004, 7
  %v1006 = vsub.s32 5, %v1005
  %v1007 = vrot.slane %v155, %v1006
  %v1010 = vlaneseq
  %v1011 = vshrl.u32 %v1010, 7
  %v1012 = vsub.s32 1, %v1011
  %v1013 = vrot.slane %v1003, %v1012
  %v1014 = vlaneseq
  %v1015 = vshrl.u32 %v1014, 7
  %v1016 = vsub.s32 1, %v1015
  %v1017 = vrot.slane %v1007, %v1016
  %1019 = vrot.lane.b32.xlu0 %v994, 32
  %v1020 = vpop.permute.xlu0 %1019
  %v1025 = vunpack.c.l.b16 %v995
  %v1026 = vunpack.c.h.b16 %v995
  %v1027 = vunpack.c.l.b16 %v996
  %v1028 = vunpack.c.h.b16 %v996
  %v1029 = vunpack.c.l.b16 %v997
  %v1030 = vunpack.c.h.b16 %v997
  %v1031 = vunpack.c.l.b16 %v998
  %v1032 = vunpack.c.h.b16 %v998
  %v1033 = vpack.c.b16 %v1027, %v1025
  %v1034 = vpack.c.b16 %v1028, %v1026
  %v1035 = vpack.c.b16 %v1031, %v1029
  %v1036 = vpack.c.b16 %v1032, %v1030
  %v1042 = vsel %vm492, %v1020, 0
  %1044 = vmatprep.subr.bf16.mxu0 0
  %1045 = vmatpush1.bf16.msra.mxu0 0
  %1046 = vmatprep.subr.bf16.mxu0 0
  %1047 = vmatpush1.bf16.msra.mxu0 0
  %1048 = vmatprep.subr.bf16.mxu0 0
  %1049 = vmatpush1.bf16.msra.mxu0 0
  %1050 = vmatprep.subr.bf16.mxu0 0
  %1051 = vmatpush1.bf16.msra.mxu0 0
  %1052 = vmatprep.subr.bf16.mxu0 0
  %1053 = vmatpush1.bf16.msra.mxu0 0
  %1054 = vmatprep.subr.bf16.mxu0 0
  %1055 = vmatpush1.bf16.msra.mxu0 0
  %1056 = vmatprep.subr.bf16.mxu0 %v1036
  %1057 = vmatpush1.bf16.msra.mxu0 %v1035
  %1058 = vmatprep.subr.bf16.mxu0 %v1034
  %1059 = vmatpush1.bf16.msra.mxu0 %v1033
  %1060 = vmatprep.subr.bf16.mxu0 0
  %1061 = vmatpush2.bf16.msra.mxu0 0
  %1062 = vmatprep.subr.bf16.mxu0 0
  %1063 = vmatpush2.bf16.msra.mxu0 0
  %1064 = vmatprep.subr.bf16.mxu0 0
  %1065 = vmatpush2.bf16.msra.mxu0 0
  %1066 = vmatprep.subr.bf16.mxu0 0
  %1067 = vmatpush2.bf16.msra.mxu0 0
  %1068 = vmatprep.subr.bf16.mxu0 0
  %1069 = vmatpush2.bf16.msra.mxu0 0
  %1070 = vmatprep.subr.bf16.mxu0 0
  %1071 = vmatpush2.bf16.msra.mxu0 0
  %1072 = vmatprep.subr.bf16.mxu0 0
  %1073 = vmatpush2.bf16.msra.mxu0 0
  %1074 = vmatprep.subr.bf16.mxu0 0
  %1075 = vmatpush2.bf16.msra.mxu0 0
  %1076 = vmatprep.mubr.bf16.mxu0 0
  %1077 = vmatmul.mubr.bf16.gmra.mxu0 %v1042
  %v1078 = vpop.f32.mrf.mxu0
  %v1079 = vadd.f32 %v1013, %v1078
  %v1080 = vpop.f32.mrf.mxu0
  %v1081 = vadd.f32 %v1017, %v1080
  %v1082 = vpop.f32.mrf.mxu0
  %v1083 = vpop.f32.mrf.mxu0
  %1084 = vdwg.mxu0
  %v1085 = vmax.f32 %v1079, 0.0
  %v1086 = vmax.f32 %v1081, 0.0
  %v1087 = vpack.c.bf16 %v1085, %v1085
  %v1088 = vpack.c.bf16 %v1086, %v1086
  %v1089 = vld [vmem:[#allocation3] sm:$0xf]
  %v1090 = vld [vmem:[#allocation3 + $0x4] sm:$0xf]
  %v1091 = vld [vmem:[#allocation3 + $0x8] sm:$0xf]
  %v1092 = vld [vmem:[#allocation3 + $0xc] sm:$0xf]
  %v1093 = vld [vmem:[#allocation3 + $0x10] sm:$0xf]
  %v1094 = vld [vmem:[#allocation3 + $0x14] sm:$0xf]
  %v1095 = vld [vmem:[#allocation3 + $0x18] sm:$0xf]
  %v1096 = vld [vmem:[#allocation3 + $0x1c] sm:$0xf]
  %v1097 = vld [vmem:[#allocation3 + $0x20] sm:$0xf]
  %v1098 = vld [vmem:[#allocation3 + $0x24] sm:$0xf]
  %v1099 = vld [vmem:[#allocation3 + $0x28] sm:$0xf]
  %v1100 = vld [vmem:[#allocation3 + $0x2c] sm:$0xf]
  %v1101 = vld [vmem:[#allocation3 + $0x30] sm:$0xf]
  %v1102 = vld [vmem:[#allocation3 + $0x34] sm:$0xf]
  %v1103 = vld [vmem:[#allocation3 + $0x38] sm:$0xf]
  %v1104 = vld [vmem:[#allocation3 + $0x3c] sm:$0xf]
  %v1105 = vld [vmem:[#allocation3 + $0x40] sm:$0xf]
  %v1106 = vld [vmem:[#allocation3 + $0x44] sm:$0xf]
  %v1107 = vld [vmem:[#allocation3 + $0x48] sm:$0xf]
  %v1108 = vld [vmem:[#allocation3 + $0x4c] sm:$0xf]
  %v1109 = vld [vmem:[#allocation3 + $0x50] sm:$0xf]
  %v1110 = vld [vmem:[#allocation3 + $0x54] sm:$0xf]
  %v1111 = vld [vmem:[#allocation3 + $0x58] sm:$0xf]
  %v1112 = vld [vmem:[#allocation3 + $0x5c] sm:$0xf]
  %v1113 = vld [vmem:[#allocation3 + $0x60] sm:$0xf]
  %v1114 = vld [vmem:[#allocation3 + $0x64] sm:$0xf]
  %v1115 = vld [vmem:[#allocation3 + $0x68] sm:$0xf]
  %v1116 = vld [vmem:[#allocation3 + $0x6c] sm:$0xf]
  %v1117 = vld [vmem:[#allocation3 + $0x70] sm:$0xf]
  %v1118 = vld [vmem:[#allocation3 + $0x74] sm:$0xf]
  %v1119 = vld [vmem:[#allocation3 + $0x78] sm:$0xf]
  %v1120 = vld [vmem:[#allocation3 + $0x7c] sm:$0xf]
  %v1121 = vlaneseq
  %v1122 = vshrl.u32 %v1121, 7
  %v1123 = vsub.s32 2, %v1122
  %v1124 = vrot.slane %v155, %v1123
  %v1157 = vunpack.c.l.b16 %v1089
  %v1158 = vunpack.c.l.b16 %v1090
  %v1159 = vunpack.c.l.b16 %v1091
  %v1160 = vunpack.c.l.b16 %v1092
  %v1161 = vunpack.c.l.b16 %v1093
  %v1162 = vunpack.c.l.b16 %v1094
  %v1163 = vunpack.c.l.b16 %v1095
  %v1164 = vunpack.c.l.b16 %v1096
  %v1165 = vunpack.c.l.b16 %v1097
  %v1166 = vunpack.c.l.b16 %v1098
  %v1167 = vunpack.c.l.b16 %v1099
  %v1168 = vunpack.c.l.b16 %v1100
  %v1169 = vunpack.c.l.b16 %v1101
  %v1170 = vunpack.c.l.b16 %v1102
  %v1171 = vunpack.c.l.b16 %v1103
  %v1172 = vunpack.c.l.b16 %v1104
  %v1173 = vunpack.c.l.b16 %v1105
  %v1174 = vunpack.c.l.b16 %v1106
  %v1175 = vunpack.c.l.b16 %v1107
  %v1176 = vunpack.c.l.b16 %v1108
  %v1177 = vunpack.c.l.b16 %v1109
  %v1178 = vunpack.c.l.b16 %v1110
  %v1179 = vunpack.c.l.b16 %v1111
  %v1180 = vunpack.c.l.b16 %v1112
  %v1181 = vunpack.c.l.b16 %v1113
  %v1182 = vunpack.c.l.b16 %v1114
  %v1183 = vunpack.c.l.b16 %v1115
  %v1184 = vunpack.c.l.b16 %v1116
  %v1185 = vunpack.c.l.b16 %v1117
  %v1186 = vunpack.c.l.b16 %v1118
  %v1187 = vunpack.c.l.b16 %v1119
  %v1188 = vunpack.c.l.b16 %v1120
  %v1189 = vpack.c.b16 %v1158, %v1157
  %v1190 = vpack.c.b16 %v1160, %v1159
  %v1191 = vpack.c.b16 %v1162, %v1161
  %v1192 = vpack.c.b16 %v1164, %v1163
  %v1193 = vpack.c.b16 %v1166, %v1165
  %v1194 = vpack.c.b16 %v1168, %v1167
  %v1195 = vpack.c.b16 %v1170, %v1169
  %v1196 = vpack.c.b16 %v1172, %v1171
  %v1197 = vpack.c.b16 %v1174, %v1173
  %v1198 = vpack.c.b16 %v1176, %v1175
  %v1199 = vpack.c.b16 %v1178, %v1177
  %v1200 = vpack.c.b16 %v1180, %v1179
  %v1201 = vpack.c.b16 %v1182, %v1181
  %v1202 = vpack.c.b16 %v1184, %v1183
  %v1203 = vpack.c.b16 %v1186, %v1185
  %v1204 = vpack.c.b16 %v1188, %v1187
  %1221 = vmatprep.subr.bf16.mxu0 0
  %1222 = vmatpush1.bf16.msra.mxu0 %v1196
  %1223 = vmatprep.subr.bf16.mxu0 0
  %1224 = vmatpush1.bf16.msra.mxu0 %v1195
  %1225 = vmatprep.subr.bf16.mxu0 0
  %1226 = vmatpush1.bf16.msra.mxu0 %v1194
  %1227 = vmatprep.subr.bf16.mxu0 0
  %1228 = vmatpush1.bf16.msra.mxu0 %v1193
  %1229 = vmatprep.subr.bf16.mxu0 0
  %1230 = vmatpush1.bf16.msra.mxu0 %v1192
  %1231 = vmatprep.subr.bf16.mxu0 0
  %1232 = vmatpush1.bf16.msra.mxu0 %v1191
  %1233 = vmatprep.subr.bf16.mxu0 0
  %1234 = vmatpush1.bf16.msra.mxu0 %v1190
  %1235 = vmatprep.subr.bf16.mxu0 0
  %1236 = vmatpush1.bf16.msra.mxu0 %v1189
  %1237 = vmatprep.subr.bf16.mxu0 0
  %1238 = vmatpush2.bf16.msra.mxu0 %v1204
  %1239 = vmatprep.subr.bf16.mxu0 0
  %1240 = vmatpush2.bf16.msra.mxu0 %v1203
  %1241 = vmatprep.subr.bf16.mxu0 0
  %1242 = vmatpush2.bf16.msra.mxu0 %v1202
  %1243 = vmatprep.subr.bf16.mxu0 0
  %1244 = vmatpush2.bf16.msra.mxu0 %v1201
  %1245 = vmatprep.subr.bf16.mxu0 0
  %1246 = vmatpush2.bf16.msra.mxu0 %v1200
  %1247 = vmatprep.subr.bf16.mxu0 0
  %1248 = vmatpush2.bf16.msra.mxu0 %v1199
  %1249 = vmatprep.subr.bf16.mxu0 0
  %1250 = vmatpush2.bf16.msra.mxu0 %v1198
  %1251 = vmatprep.subr.bf16.mxu0 0
  %1252 = vmatpush2.bf16.msra.mxu0 %v1197
  %1253 = vmatprep.mubr.bf16.mxu0 %v1088
  %1254 = vmatmul.mubr.bf16.gmra.mxu0 %v1087
  %v1255 = vpop.f32.mrf.mxu0
  %v1256 = vadd.f32 %v1124, %v1255
  %v1257 = vpop.f32.mrf.mxu0
  %v1258 = vpop.f32.mrf.mxu0
  %v1259 = vpop.f32.mrf.mxu0
  %1260 = vdwg.mxu0
  %v1261 = vmax.f32 %v1256, 0.0
  %v1262 = vpack.c.bf16 %v1261, %v1261
  %v1263 = vld [vmem:[%s9] sm:$0xf]
  %v1264 = vld [vmem:[%s9 + $0x4] sm:$0xf]
  %v1265 = vld [vmem:[%s9 + $0x8] sm:$0xf]
  %v1266 = vld [vmem:[%s9 + $0xc] sm:$0xf]
  %v1267 = vld [vmem:[%s9 + $0x10] sm:$0xf]
  %v1268 = vld [vmem:[%s9 + $0x14] sm:$0xf]
  %v1269 = vld [vmem:[%s9 + $0x18] sm:$0xf]
  %v1270 = vld [vmem:[%s9 + $0x1c] sm:$0xf]
  %v1271 = vld [vmem:[%s9 + $0x20] sm:$0xf]
  %v1272 = vld [vmem:[%s9 + $0x24] sm:$0xf]
  %v1273 = vld [vmem:[%s9 + $0x28] sm:$0xf]
  %v1274 = vld [vmem:[%s9 + $0x2c] sm:$0xf]
  %v1275 = vld [vmem:[%s9 + $0x30] sm:$0xf]
  %v1276 = vld [vmem:[%s9 + $0x34] sm:$0xf]
  %v1277 = vld [vmem:[%s9 + $0x38] sm:$0xf]
  %v1278 = vld [vmem:[%s9 + $0x3c] sm:$0xf]
  %v1279 = vlaneseq
  %v1280 = vshrl.u32 %v1279, 7
  %v1281 = vsub.s32 3, %v1280
  %v1282 = vrot.slane %v155, %v1281
  %v1299 = vunpack.c.l.b16 %v1263
  %v1300 = vunpack.c.l.b16 %v1264
  %v1301 = vunpack.c.l.b16 %v1265
  %v1302 = vunpack.c.l.b16 %v1266
  %v1303 = vunpack.c.l.b16 %v1267
  %v1304 = vunpack.c.l.b16 %v1268
  %v1305 = vunpack.c.l.b16 %v1269
  %v1306 = vunpack.c.l.b16 %v1270
  %v1307 = vunpack.c.l.b16 %v1271
  %v1308 = vunpack.c.l.b16 %v1272
  %v1309 = vunpack.c.l.b16 %v1273
  %v1310 = vunpack.c.l.b16 %v1274
  %v1311 = vunpack.c.l.b16 %v1275
  %v1312 = vunpack.c.l.b16 %v1276
  %v1313 = vunpack.c.l.b16 %v1277
  %v1314 = vunpack.c.l.b16 %v1278
  %v1315 = vpack.c.b16 %v1300, %v1299
  %v1316 = vpack.c.b16 %v1302, %v1301
  %v1317 = vpack.c.b16 %v1304, %v1303
  %v1318 = vpack.c.b16 %v1306, %v1305
  %v1319 = vpack.c.b16 %v1308, %v1307
  %v1320 = vpack.c.b16 %v1310, %v1309
  %v1321 = vpack.c.b16 %v1312, %v1311
  %v1322 = vpack.c.b16 %v1314, %v1313
  %1331 = vmatprep.subr.bf16.mxu0 0
  %1332 = vmatpush1.bf16.msra.mxu0 %v1322
  %1333 = vmatprep.subr.bf16.mxu0 0
  %1334 = vmatpush1.bf16.msra.mxu0 %v1321
  %1335 = vmatprep.subr.bf16.mxu0 0
  %1336 = vmatpush1.bf16.msra.mxu0 %v1320
  %1337 = vmatprep.subr.bf16.mxu0 0
  %1338 = vmatpush1.bf16.msra.mxu0 %v1319
  %1339 = vmatprep.subr.bf16.mxu0 0
  %1340 = vmatpush1.bf16.msra.mxu0 %v1318
  %1341 = vmatprep.subr.bf16.mxu0 0
  %1342 = vmatpush1.bf16.msra.mxu0 %v1317
  %1343 = vmatprep.subr.bf16.mxu0 0
  %1344 = vmatpush1.bf16.msra.mxu0 %v1316
  %1345 = vmatprep.subr.bf16.mxu0 0
  %1346 = vmatpush1.bf16.msra.mxu0 %v1315
  %1347 = vmatprep.subr.bf16.mxu0 0
  %1348 = vmatpush2.bf16.msra.mxu0 0
  %1349 = vmatprep.subr.bf16.mxu0 0
  %1350 = vmatpush2.bf16.msra.mxu0 0
  %1351 = vmatprep.subr.bf16.mxu0 0
  %1352 = vmatpush2.bf16.msra.mxu0 0
  %1353 = vmatprep.subr.bf16.mxu0 0
  %1354 = vmatpush2.bf16.msra.mxu0 0
  %1355 = vmatprep.subr.bf16.mxu0 0
  %1356 = vmatpush2.bf16.msra.mxu0 0
  %1357 = vmatprep.subr.bf16.mxu0 0
  %1358 = vmatpush2.bf16.msra.mxu0 0
  %1359 = vmatprep.subr.bf16.mxu0 0
  %1360 = vmatpush2.bf16.msra.mxu0 0
  %1361 = vmatprep.subr.bf16.mxu0 0
  %1362 = vmatpush2.bf16.msra.mxu0 0
  %1363 = vmatprep.mubr.bf16.mxu0 0
  %1364 = vmatmul.mubr.bf16.gmra.mxu0 %v1262
  %v1365 = vpop.f32.mrf.mxu0
  %v1366 = vadd.f32 %v1282, %v1365
  %v1367 = vpop.f32.mrf.mxu0
  %v1368 = vpop.f32.mrf.mxu0
  %v1369 = vpop.f32.mrf.mxu0
  %1370 = vdwg.mxu0
  %1371 = vst [vmem:[%s10] sm:$0xff] %v1366
  // Predicated region
  $region102: #{forward.1} parent=0 // pred_check
    _
  $region103: #{forward.1} parent=0 // pred_check_branch
    %1373 = sbr.rel (0) target = $region105
  $region104: #{forward.1} parent=0 // pred_region
    _
  $region105: #{forward.1} parent=0 // pred_fallthru
    _
  // Predicated region
  $region106: #{forward.1} parent=0 // pred_check
    _
  $region107: #{forward.1} parent=0 // pred_check_branch
    %1375 = sbr.rel (0) target = $region109
  $region108: #{forward.1} parent=0 // pred_region
    _
  $region109: #{forward.1} parent=0 // pred_fallthru
    _
  %1376 = vsyncmov [#allocation4]
  %s1377 = vpop.sfrf %1376
  %p1378 = scmp.eq.s32.totalorder %s1377, 0
  %p1379 = pneg %p1378
  %1381 = shalt.err (%p1379)
  %s1382 = scalar_lea.sflag [#allocation4], 1
  %1383 = vsyncmov %s1382
  %s1384 = vpop.sfrf %1383
  %p1385 = scmp.eq.s32.totalorder %s1384, 0
  %p1386 = pneg %p1385
  %1388 = shalt.err (%p1386)

</llo_original>
